<compile_context>
chip_gen: v7x
topology: tpu7x:2x2x1
jax: 0.10.0
libtpu: 0.0.40
codegen_flags: <defaults>
</compile_context>

<pallas_src>
import functools

import jax
import jax.numpy as jnp
from jax.experimental import pallas as pl
from jax.experimental.pallas import tpu as pltpu

LAMBDA_1 = 1e-3          # cfg.LAMBDA_1 (SANet default)
SIGMA = 1                # cfg.SIGMA -> gaussian layer kernel = 6*sigma+1 = 7
GS_K = 6 * SIGMA + 1
SSIM_WIN = 11
SSIM_SIGMA = 1.5
C1 = 0.01 ** 2
C2 = 0.03 ** 2


def _round_up(x, m):
    return ((x + m - 1) // m) * m


# ---------------------------------------------------------------------------
# Fused forward kernel: one grid step == one batch sample.
# ---------------------------------------------------------------------------
def _fused_kernel(img_ref, gt_ref, w1_ref, b1_ref, w2_ref, b2_ref,
                  cmask_ref, gvw_ref, ghw_ref, svw_ref, shw_ref,
                  pred_ref, loss_ref, stack_ref, *, H, W, C8):
    HW = H * W

    def shifted(x, d):
        # out[..., i] = x[..., i + d]; lanes that wrap rows / the image are
        # zeroed by the precomputed masks, so a plain lane rotate is enough.
        return x if d == 0 else pltpu.roll(x, (-d) % HW, axis=x.ndim - 1)

    def conv3x3(x, w_ref, b_ref):
        # Stage the nine rolled+masked tap blocks, then ONE K=9*C8 MXU dot
        # (instead of nine K=C8 dots).  stack_ref is fully overwritten here.
        for k in range(9):
            dh, dw = k // 3 - 1, k % 3 - 1
            stack_ref[k * C8:(k + 1) * C8, :] = (
                shifted(x, dh * W + dw) * cmask_ref[k:k + 1, :])
        y = jnp.dot(w_ref[...], stack_ref[...],
                    preferred_element_type=jnp.float32)          # (Cout8, HW)
        return y + b_ref[...]                                    # lane-bcast bias

    def sep_blur(x, vw_ref, hw_ref, ntaps):
        # Separable 'same' blur with zero padding; the padding mask is folded
        # into the per-tap weight rows (vw/hw), so each tap is one roll+vmul.
        r = ntaps // 2
        acc = None
        for t in range(ntaps):
            term = shifted(x, (t - r) * W) * vw_ref[t:t + 1, :]
            acc = term if acc is None else acc + term
        out = None
        for t in range(ntaps):
            term = shifted(acc, t - r) * hw_ref[t:t + 1, :]
            out = term if out is None else out + term
        return out

    # ---- CCN stand-in: conv3x3 -> ReLU -> conv3x3 (hidden never leaves VMEM)
    x = img_ref[0, :, :]                                          # (C8, HW)
    h = jnp.maximum(conv3x3(x, w1_ref, b1_ref), 0.0)              # (C8, HW)
    pred = conv3x3(h, w2_ref, b2_ref)[0:1, :]                     # (1, HW)
    pred_ref[0, :, :] = pred

    # ---- Gaussianlayer: separable 7-tap blur of the gt dot-map --------------
    den = sep_blur(gt_ref[0, :, :], gvw_ref, ghw_ref, GS_K)       # (1, HW)

    # ---- loss_1 partial: per-sample SSE --------------------------------------
    d = pred - den
    sse = jnp.sum(d * d, keepdims=True)                           # (1, 1)

    # ---- loss_2 partial: SSIM; five maps blurred together in one (8,HW) slab -
    # Reuse stack_ref (conv staging is dead now); rows 5..7 are stale filler
    # that is never read back (blur mixes nothing across sublanes).
    stack_ref[0:1, :] = pred
    stack_ref[1:2, :] = den
    stack_ref[2:3, :] = pred * pred
    stack_ref[3:4, :] = den * den
    stack_ref[4:5, :] = pred * den
    blur = sep_blur(stack_ref[0:8, :], svw_ref, shw_ref, SSIM_WIN)  # (8, HW)
    mu1, mu2 = blur[0:1, :], blur[1:2, :]
    e11, e22, e12 = blur[2:3, :], blur[3:4, :], blur[4:5, :]
    mu1_sq, mu2_sq, mu1mu2 = mu1 * mu1, mu2 * mu2, mu1 * mu2
    sigma1_sq = e11 - mu1_sq
    sigma2_sq = e22 - mu2_sq
    sigma12 = e12 - mu1mu2
    num = (2.0 * mu1mu2 + C1) * (2.0 * sigma12 + C2)
    den_s = (mu1_sq + mu2_sq + C1) * (sigma1_sq + sigma2_sq + C2)
    # Exact divide keeps loss_2 faithful to the PyTorch reference;
    # pl.reciprocal(den_s, approx=True) would move this to the EUP slot.
    ssim_sum = jnp.sum(num / den_s, keepdims=True)                # (1, 1)

    # ---- lane-dense loss writeback: row 0 = SSE, row 1 = SSIM sum -----------
    loss_ref[0, 0:1, :] = jnp.broadcast_to(sse, (1, 128))
    loss_ref[0, 1:2, :] = jnp.broadcast_to(ssim_sum, (1, 128))


# ---------------------------------------------------------------------------
# Host-side parameter / constant construction (deterministic, synthetic)
# ---------------------------------------------------------------------------
def _gaussian_1d(ksize, sigma):
    ax = jnp.arange(ksize, dtype=jnp.float32) - (ksize // 2)
    g = jnp.exp(-(ax ** 2) / (2.0 * sigma ** 2))
    return (g / jnp.sum(g)).astype(jnp.float32)


def _prep_conv_w(w, cout_pad, cin_pad):
    """PyTorch OIHW (Cout,Cin,3,3) -> flattened (cout_pad, 9*cin_pad) matrix;
    column k*cin_pad + ci holds w[:, ci, kh, kw] for tap k = kh*3 + kw."""
    cout, cin, kh, kw = w.shape
    taps = jnp.transpose(w, (2, 3, 0, 1)).reshape(kh * kw, cout, cin)
    taps = jnp.pad(taps, ((0, 0), (0, cout_pad - cout), (0, cin_pad - cin)))
    return (jnp.transpose(taps, (1, 0, 2))
            .reshape(cout_pad, kh * kw * cin_pad).astype(jnp.float32))


def _conv3x3_mask(H, W):
    """(9, H*W) 0/1 rows: tap k=(dh+1)*3+(dw+1) is valid at output position i
    iff the shifted source (row+dh, col+dw) lies inside the image."""
    idx = jnp.arange(H * W, dtype=jnp.int32)
    rows, cols = idx // W, idx % W
    m = []
    for k in range(9):
        dh, dw = k // 3 - 1, k % 3 - 1
        ok = ((rows + dh >= 0) & (rows + dh < H) &
              (cols + dw >= 0) & (cols + dw < W))
        m.append(ok.astype(jnp.float32))
    return jnp.stack(m)


def _sep_masked_weights(w1d, H, W):
    """Per-tap 1-D blur weights with the zero-padding validity mask folded in:
    vertical row t = w[t]*[0<=row+t-r<H], horizontal row t = w[t]*[0<=col+t-r<W]."""
    ntaps = int(w1d.shape[0])
    r = ntaps // 2
    idx = jnp.arange(H * W, dtype=jnp.int32)
    rows, cols = idx // W, idx % W
    vw, hw = [], []
    for t in range(ntaps):
        d = t - r
        vw.append(w1d[t] * ((rows + d >= 0) & (rows + d < H)).astype(jnp.float32))
        hw.append(w1d[t] * ((cols + d >= 0) & (cols + d < W)).astype(jnp.float32))
    return jnp.stack(vw), jnp.stack(hw)


def init_params(key, cin=3, hidden=8):
    k1, k2 = jax.random.split(key, 2)
    w1 = 0.1 * jax.random.normal(k1, (hidden, cin, 3, 3), jnp.float32)
    b1 = jnp.zeros((hidden,), jnp.float32)
    w2 = 0.1 * jax.random.normal(k2, (1, hidden, 3, 3), jnp.float32)
    b2 = jnp.zeros((1,), jnp.float32)
    # The 2-D gaussian windows are outer(g1, g1) -> keep only the 1-D factors.
    return dict(w1=w1, b1=b1, w2=w2, b2=b2,
                gs_w1d=_gaussian_1d(GS_K, float(SIGMA)),
                ssim_w1d=_gaussian_1d(SSIM_WIN, SSIM_SIGMA))


# ---------------------------------------------------------------------------
# CrowdCounter.forward
# ---------------------------------------------------------------------------
def crowd_counter_forward(params, img, gt_map):
    # TODO(synk): the real backbone is dynamic (getattr(models, model_name),
    # e.g. SANet); a small conv3x3->ReLU->conv3x3 stack stands in for it.
    N, Cin, H, W = img.shape
    hidden = params['w1'].shape[0]
    HW = H * W
    assert HW % 128 == 0, "flattened spatial dim must be lane-aligned"

    cin_p = _round_up(max(Cin, 8), 8)
    hid_p = _round_up(max(hidden, 8), 8)
    assert cin_p == hid_p      # lets both convs reuse one (9*C8, HW) staging buf
    C8 = cin_p
    cout_p = 8                 # 1-channel head padded for the MXU

    w1f = _prep_conv_w(params['w1'], hid_p, cin_p)              # (8, 72)
    w2f = _prep_conv_w(params['w2'], cout_p, hid_p)             # (8, 72)
    b1c = jnp.pad(params['b1'].reshape(hidden, 1).astype(jnp.float32),
                  ((0, hid_p - hidden), (0, 0)))
    b2c = jnp.pad(params['b2'].reshape(1, 1).astype(jnp.float32),
                  ((0, cout_p - 1), (0, 0)))

    cmask = _conv3x3_mask(H, W)                                 # (9, HW)
    gvw, ghw = _sep_masked_weights(params['gs_w1d'], H, W)      # (7, HW) x2
    svw, shw = _sep_masked_weights(params['ssim_w1d'], H, W)    # (11, HW) x2

    # Lane-dense layout: spatial flattened to HW; channels zero-padded to C8.
    img_f = jnp.pad(img.astype(jnp.float32).reshape(N, Cin, HW),
                    ((0, 0), (0, cin_p - Cin), (0, 0)))
    gt_f = gt_map.astype(jnp.float32).reshape(N, 1, HW)

    kern = functools.partial(_fused_kernel, H=H, W=W, C8=C8)

    # TODO(synk): for large N / realistic resolutions, fold several samples (or
    # H-tiles with halo-aware masks) into each grid step; keep >= 2 parallel
    # steps so both v7x TensorCores stay busy, and size tiles for v7x's 64 MiB
    # VMEM (roughly half of what v5e/v6e allow).
    pred_flat, losses = pl.pallas_call(
        kern,
        out_shape=(jax.ShapeDtypeStruct((N, 1, HW), jnp.float32),
                   jax.ShapeDtypeStruct((N, 2, 128), jnp.float32)),
        grid=(N,),
        in_specs=[
            pl.BlockSpec((1, C8, HW), lambda n: (n, 0, 0)),          # img
            pl.BlockSpec((1, 1, HW), lambda n: (n, 0, 0)),           # gt map
            pl.BlockSpec((hid_p, 9 * cin_p), lambda n: (0, 0)),      # conv1 W
            pl.BlockSpec((hid_p, 1), lambda n: (0, 0)),              # bias1
            pl.BlockSpec((cout_p, 9 * hid_p), lambda n: (0, 0)),     # conv2 W
            pl.BlockSpec((cout_p, 1), lambda n: (0, 0)),             # bias2
            pl.BlockSpec((9, HW), lambda n: (0, 0)),                 # conv mask
            pl.BlockSpec((GS_K, HW), lambda n: (0, 0)),              # gauss vert w
            pl.BlockSpec((GS_K, HW), lambda n: (0, 0)),              # gauss horiz w
            pl.BlockSpec((SSIM_WIN, HW), lambda n: (0, 0)),          # ssim vert w
            pl.BlockSpec((SSIM_WIN, HW), lambda n: (0, 0)),          # ssim horiz w
        ],
        out_specs=(
            pl.BlockSpec((1, 1, HW), lambda n: (n, 0, 0)),           # pred
            pl.BlockSpec((1, 2, 128), lambda n: (n, 0, 0)),          # loss partials
        ),
        scratch_shapes=[pltpu.VMEM((9 * C8, HW), jnp.float32)],      # conv staging
        compiler_params=pltpu.CompilerParams(
            dimension_semantics=("parallel",),
            vmem_limit_bytes=32 * 1024 * 1024),
    )(img_f, gt_f, w1f, b1c, w2f, b2c, cmask, gvw, ghw, svw, shw)

    pred = pred_flat.reshape(N, 1, H, W)
    n_el = float(N * H * W)
    loss_1 = jnp.sum(losses[:, 0, 0]) / n_el            # nn.MSELoss (mean)
    loss_2 = 1.0 - jnp.sum(losses[:, 1, 0]) / n_el      # 1 - SSIM (size_average)
    total_loss = (loss_1, loss_2 * LAMBDA_1)             # .loss property
    return pred, loss_1, loss_2, total_loss


if __name__ == "__main__":
    key = jax.random.PRNGKey(0)
    k_img, k_gt, k_par = jax.random.split(key, 3)

    N, C, H, W = 2, 3, 16, 16
    img = jax.random.normal(k_img, (N, C, H, W), dtype=jnp.float32)
    # gt dot-map: sparse non-negative "head" annotations
    gt_map = (jax.random.uniform(k_gt, (N, H, W)) > 0.95).astype(jnp.float32)

    params = init_params(k_par, cin=C, hidden=8)

    pred, loss_1, loss_2, total_loss = crowd_counter_forward(params, img, gt_map)
    jax.block_until_ready((pred, loss_1, loss_2, total_loss))
    assert pred.shape == (N, 1, H, W)
    print("KERNEL_OK")
</pallas_src>

<mosaic_0001>
module attributes {stable_mosaic.version = 11 : i64} {
  func.func @_fused_kernel(%arg0: i32, %arg1: memref<1x8x256xf32, #tpu.memory_space<vmem>>, %arg2: memref<1x1x256xf32, #tpu.memory_space<vmem>>, %arg3: memref<8x72xf32, #tpu.memory_space<vmem>>, %arg4: memref<8x1xf32, #tpu.memory_space<vmem>>, %arg5: memref<8x72xf32, #tpu.memory_space<vmem>>, %arg6: memref<8x1xf32, #tpu.memory_space<vmem>>, %arg7: memref<9x256xf32, #tpu.memory_space<vmem>>, %arg8: memref<7x256xf32, #tpu.memory_space<vmem>>, %arg9: memref<7x256xf32, #tpu.memory_space<vmem>>, %arg10: memref<11x256xf32, #tpu.memory_space<vmem>>, %arg11: memref<11x256xf32, #tpu.memory_space<vmem>>, %arg12: memref<1x1x256xf32, #tpu.memory_space<vmem>>, %arg13: memref<1x2x128xf32, #tpu.memory_space<vmem>>, %arg14: memref<72x256xf32, #tpu.memory_space<vmem>>) attributes {dimension_semantics = [#tpu.dimension_semantics<parallel>], iteration_bounds = array<i64: 2>, scalar_prefetch = 0 : i64, scratch_operands = 1 : i64, tpu.core_type = #tpu.core_type<tc>, window_params = [{transform_indices = @transform_0, window_bounds = array<i64: 1, 8, 256>}, {transform_indices = @transform_1, window_bounds = array<i64: 1, 1, 256>}, {pipeline_mode = #tpu.pipeline_mode<synchronous>, transform_indices = @transform_2, window_bounds = array<i64: 8, 72>}, {pipeline_mode = #tpu.pipeline_mode<synchronous>, transform_indices = @transform_3, window_bounds = array<i64: 8, 1>}, {pipeline_mode = #tpu.pipeline_mode<synchronous>, transform_indices = @transform_4, window_bounds = array<i64: 8, 72>}, {pipeline_mode = #tpu.pipeline_mode<synchronous>, transform_indices = @transform_5, window_bounds = array<i64: 8, 1>}, {pipeline_mode = #tpu.pipeline_mode<synchronous>, transform_indices = @transform_6, window_bounds = array<i64: 9, 256>}, {pipeline_mode = #tpu.pipeline_mode<synchronous>, transform_indices = @transform_7, window_bounds = array<i64: 7, 256>}, {pipeline_mode = #tpu.pipeline_mode<synchronous>, transform_indices = @transform_8, window_bounds = array<i64: 7, 256>}, {pipeline_mode = #tpu.pipeline_mode<synchronous>, transform_indices = @transform_9, window_bounds = array<i64: 11, 256>}, {pipeline_mode = #tpu.pipeline_mode<synchronous>, transform_indices = @transform_10, window_bounds = array<i64: 11, 256>}, {transform_indices = @transform_11, window_bounds = array<i64: 1, 1, 256>}, {transform_indices = @transform_12, window_bounds = array<i64: 1, 2, 128>}]} {
    %c0 = arith.constant 0 : index
    %c0_0 = arith.constant 0 : index
    %c0_1 = arith.constant 0 : index
    %0 = vector.load %arg1[%c0, %c0_0, %c0_1] : memref<1x8x256xf32, #tpu.memory_space<vmem>>, vector<1x8x256xf32>
    %1 = vector.shape_cast %0 : vector<1x8x256xf32> to vector<8x256xf32>
    %c17_i32 = arith.constant 17 : i32
    %2 = tpu.dynamic_rotate %1 by %c17_i32 dim 1 : vector<8x256xf32>, i32 -> vector<8x256xf32>
    %c0_2 = arith.constant 0 : index
    %c0_3 = arith.constant 0 : index
    %3 = vector.load %arg7[%c0_2, %c0_3] : memref<9x256xf32, #tpu.memory_space<vmem>>, vector<1x256xf32>
    %4 = vector.broadcast %3 : vector<1x256xf32> to vector<8x256xf32>
    %5 = arith.mulf %2, %4 : vector<8x256xf32>
    %c0_4 = arith.constant 0 : index
    %c0_5 = arith.constant 0 : index
    %6 = vector.load %arg14[%c0_4, %c0_5] : memref<72x256xf32, #tpu.memory_space<vmem>>, vector<8x256xf32>
    tpu.vector_store %arg14[%c0_4, %c0_5], %5 {strides = array<i32>} : memref<72x256xf32, #tpu.memory_space<vmem>>, vector<8x256xf32>,
    %c16_i32 = arith.constant 16 : i32
    %7 = tpu.dynamic_rotate %1 by %c16_i32 dim 1 : vector<8x256xf32>, i32 -> vector<8x256xf32>
    %c1 = arith.constant 1 : index
    %c0_6 = arith.constant 0 : index
    %8 = vector.load %arg7[%c1, %c0_6] : memref<9x256xf32, #tpu.memory_space<vmem>>, vector<1x256xf32>
    %9 = vector.broadcast %8 : vector<1x256xf32> to vector<8x256xf32>
    %10 = arith.mulf %7, %9 : vector<8x256xf32>
    %c8 = arith.constant 8 : index
    %c0_7 = arith.constant 0 : index
    %11 = vector.load %arg14[%c8, %c0_7] : memref<72x256xf32, #tpu.memory_space<vmem>>, vector<8x256xf32>
    tpu.vector_store %arg14[%c8, %c0_7], %10 {strides = array<i32>} : memref<72x256xf32, #tpu.memory_space<vmem>>, vector<8x256xf32>,
    %c15_i32 = arith.constant 15 : i32
    %12 = tpu.dynamic_rotate %1 by %c15_i32 dim 1 : vector<8x256xf32>, i32 -> vector<8x256xf32>
    %c2 = arith.constant 2 : index
    %c0_8 = arith.constant 0 : index
    %13 = vector.load %arg7[%c2, %c0_8] : memref<9x256xf32, #tpu.memory_space<vmem>>, vector<1x256xf32>
    %14 = vector.broadcast %13 : vector<1x256xf32> to vector<8x256xf32>
    %15 = arith.mulf %12, %14 : vector<8x256xf32>
    %c16 = arith.constant 16 : index
    %c0_9 = arith.constant 0 : index
    %16 = vector.load %arg14[%c16, %c0_9] : memref<72x256xf32, #tpu.memory_space<vmem>>, vector<8x256xf32>
    tpu.vector_store %arg14[%c16, %c0_9], %15 {strides = array<i32>} : memref<72x256xf32, #tpu.memory_space<vmem>>, vector<8x256xf32>,
    %c1_i32 = arith.constant 1 : i32
    %17 = tpu.dynamic_rotate %1 by %c1_i32 dim 1 : vector<8x256xf32>, i32 -> vector<8x256xf32>
    %c3 = arith.constant 3 : index
    %c0_10 = arith.constant 0 : index
    %18 = vector.load %arg7[%c3, %c0_10] : memref<9x256xf32, #tpu.memory_space<vmem>>, vector<1x256xf32>
    %19 = vector.broadcast %18 : vector<1x256xf32> to vector<8x256xf32>
    %20 = arith.mulf %17, %19 : vector<8x256xf32>
    %c24 = arith.constant 24 : index
    %c0_11 = arith.constant 0 : index
    %21 = vector.load %arg14[%c24, %c0_11] : memref<72x256xf32, #tpu.memory_space<vmem>>, vector<8x256xf32>
    tpu.vector_store %arg14[%c24, %c0_11], %20 {strides = array<i32>} : memref<72x256xf32, #tpu.memory_space<vmem>>, vector<8x256xf32>,
    %c4 = arith.constant 4 : index
    %c0_12 = arith.constant 0 : index
    %22 = vector.load %arg7[%c4, %c0_12] : memref<9x256xf32, #tpu.memory_space<vmem>>, vector<1x256xf32>
    %23 = vector.broadcast %22 : vector<1x256xf32> to vector<8x256xf32>
    %24 = arith.mulf %1, %23 : vector<8x256xf32>
    %c32 = arith.constant 32 : index
    %c0_13 = arith.constant 0 : index
    %25 = vector.load %arg14[%c32, %c0_13] : memref<72x256xf32, #tpu.memory_space<vmem>>, vector<8x256xf32>
    tpu.vector_store %arg14[%c32, %c0_13], %24 {strides = array<i32>} : memref<72x256xf32, #tpu.memory_space<vmem>>, vector<8x256xf32>,
    %c255_i32 = arith.constant 255 : i32
    %26 = tpu.dynamic_rotate %1 by %c255_i32 dim 1 : vector<8x256xf32>, i32 -> vector<8x256xf32>
    %c5 = arith.constant 5 : index
    %c0_14 = arith.constant 0 : index
    %27 = vector.load %arg7[%c5, %c0_14] : memref<9x256xf32, #tpu.memory_space<vmem>>, vector<1x256xf32>
    %28 = vector.broadcast %27 : vector<1x256xf32> to vector<8x256xf32>
    %29 = arith.mulf %26, %28 : vector<8x256xf32>
    %c40 = arith.constant 40 : index
    %c0_15 = arith.constant 0 : index
    %30 = vector.load %arg14[%c40, %c0_15] : memref<72x256xf32, #tpu.memory_space<vmem>>, vector<8x256xf32>
    tpu.vector_store %arg14[%c40, %c0_15], %29 {strides = array<i32>} : memref<72x256xf32, #tpu.memory_space<vmem>>, vector<8x256xf32>,
    %c241_i32 = arith.constant 241 : i32
    %31 = tpu.dynamic_rotate %1 by %c241_i32 dim 1 : vector<8x256xf32>, i32 -> vector<8x256xf32>
    %c6 = arith.constant 6 : index
    %c0_16 = arith.constant 0 : index
    %32 = vector.load %arg7[%c6, %c0_16] : memref<9x256xf32, #tpu.memory_space<vmem>>, vector<1x256xf32>
    %33 = vector.broadcast %32 : vector<1x256xf32> to vector<8x256xf32>
    %34 = arith.mulf %31, %33 : vector<8x256xf32>
    %c48 = arith.constant 48 : index
    %c0_17 = arith.constant 0 : index
    %35 = vector.load %arg14[%c48, %c0_17] : memref<72x256xf32, #tpu.memory_space<vmem>>, vector<8x256xf32>
    tpu.vector_store %arg14[%c48, %c0_17], %34 {strides = array<i32>} : memref<72x256xf32, #tpu.memory_space<vmem>>, vector<8x256xf32>,
    %c240_i32 = arith.constant 240 : i32
    %36 = tpu.dynamic_rotate %1 by %c240_i32 dim 1 : vector<8x256xf32>, i32 -> vector<8x256xf32>
    %c7 = arith.constant 7 : index
    %c0_18 = arith.constant 0 : index
    %37 = vector.load %arg7[%c7, %c0_18] : memref<9x256xf32, #tpu.memory_space<vmem>>, vector<1x256xf32>
    %38 = vector.broadcast %37 : vector<1x256xf32> to vector<8x256xf32>
    %39 = arith.mulf %36, %38 : vector<8x256xf32>
    %c56 = arith.constant 56 : index
    %c0_19 = arith.constant 0 : index
    %40 = vector.load %arg14[%c56, %c0_19] : memref<72x256xf32, #tpu.memory_space<vmem>>, vector<8x256xf32>
    tpu.vector_store %arg14[%c56, %c0_19], %39 {strides = array<i32>} : memref<72x256xf32, #tpu.memory_space<vmem>>, vector<8x256xf32>,
    %c239_i32 = arith.constant 239 : i32
    %41 = tpu.dynamic_rotate %1 by %c239_i32 dim 1 : vector<8x256xf32>, i32 -> vector<8x256xf32>
    %c8_20 = arith.constant 8 : index
    %c0_21 = arith.constant 0 : index
    %42 = vector.load %arg7[%c8_20, %c0_21] : memref<9x256xf32, #tpu.memory_space<vmem>>, vector<1x256xf32>
    %43 = vector.broadcast %42 : vector<1x256xf32> to vector<8x256xf32>
    %44 = arith.mulf %41, %43 : vector<8x256xf32>
    %c64 = arith.constant 64 : index
    %c0_22 = arith.constant 0 : index
    %45 = vector.load %arg14[%c64, %c0_22] : memref<72x256xf32, #tpu.memory_space<vmem>>, vector<8x256xf32>
    tpu.vector_store %arg14[%c64, %c0_22], %44 {strides = array<i32>} : memref<72x256xf32, #tpu.memory_space<vmem>>, vector<8x256xf32>,
    %c0_23 = arith.constant 0 : index
    %c0_24 = arith.constant 0 : index
    %46 = vector.load %arg3[%c0_23, %c0_24] : memref<8x72xf32, #tpu.memory_space<vmem>>, vector<8x72xf32>
    %c0_25 = arith.constant 0 : index
    %c0_26 = arith.constant 0 : index
    %47 = vector.load %arg14[%c0_25, %c0_26] : memref<72x256xf32, #tpu.memory_space<vmem>>, vector<72x256xf32>
    %cst = arith.constant dense<0.000000e+00> : vector<8x256xf32>
    %48 = tpu.matmul %46, %47, %cst {dimension_numbers = #tpu.dot_dimension_numbers<[1], [0], [0], [1], [0, 0, 1, 1], [], []>} : vector<8x72xf32>, vector<72x256xf32>, vector<8x256xf32> -> vector<8x256xf32>
    %c0_27 = arith.constant 0 : index
    %c0_28 = arith.constant 0 : index
    %49 = vector.load %arg4[%c0_27, %c0_28] : memref<8x1xf32, #tpu.memory_space<vmem>>, vector<8x1xf32>
    %50 = vector.broadcast %49 : vector<8x1xf32> to vector<8x256xf32>
    %51 = arith.addf %48, %50 : vector<8x256xf32>
    %cst_29 = arith.constant 0.000000e+00 : f32
    %52 = vector.broadcast %cst_29 : f32 to vector<8x256xf32>
    %53 = arith.maximumf %51, %52 : vector<8x256xf32>
    %c17_i32_30 = arith.constant 17 : i32
    %54 = tpu.dynamic_rotate %53 by %c17_i32_30 dim 1 : vector<8x256xf32>, i32 -> vector<8x256xf32>
    %c0_31 = arith.constant 0 : index
    %c0_32 = arith.constant 0 : index
    %55 = vector.load %arg7[%c0_31, %c0_32] : memref<9x256xf32, #tpu.memory_space<vmem>>, vector<1x256xf32>
    %56 = vector.broadcast %55 : vector<1x256xf32> to vector<8x256xf32>
    %57 = arith.mulf %54, %56 : vector<8x256xf32>
    %c0_33 = arith.constant 0 : index
    %c0_34 = arith.constant 0 : index
    %58 = vector.load %arg14[%c0_33, %c0_34] : memref<72x256xf32, #tpu.memory_space<vmem>>, vector<8x256xf32>
    tpu.vector_store %arg14[%c0_33, %c0_34], %57 {strides = array<i32>} : memref<72x256xf32, #tpu.memory_space<vmem>>, vector<8x256xf32>,
    %c16_i32_35 = arith.constant 16 : i32
    %59 = tpu.dynamic_rotate %53 by %c16_i32_35 dim 1 : vector<8x256xf32>, i32 -> vector<8x256xf32>
    %c1_36 = arith.constant 1 : index
    %c0_37 = arith.constant 0 : index
    %60 = vector.load %arg7[%c1_36, %c0_37] : memref<9x256xf32, #tpu.memory_space<vmem>>, vector<1x256xf32>
    %61 = vector.broadcast %60 : vector<1x256xf32> to vector<8x256xf32>
    %62 = arith.mulf %59, %61 : vector<8x256xf32>
    %c8_38 = arith.constant 8 : index
    %c0_39 = arith.constant 0 : index
    %63 = vector.load %arg14[%c8_38, %c0_39] : memref<72x256xf32, #tpu.memory_space<vmem>>, vector<8x256xf32>
    tpu.vector_store %arg14[%c8_38, %c0_39], %62 {strides = array<i32>} : memref<72x256xf32, #tpu.memory_space<vmem>>, vector<8x256xf32>,
    %c15_i32_40 = arith.constant 15 : i32
    %64 = tpu.dynamic_rotate %53 by %c15_i32_40 dim 1 : vector<8x256xf32>, i32 -> vector<8x256xf32>
    %c2_41 = arith.constant 2 : index
    %c0_42 = arith.constant 0 : index
    %65 = vector.load %arg7[%c2_41, %c0_42] : memref<9x256xf32, #tpu.memory_space<vmem>>, vector<1x256xf32>
    %66 = vector.broadcast %65 : vector<1x256xf32> to vector<8x256xf32>
    %67 = arith.mulf %64, %66 : vector<8x256xf32>
    %c16_43 = arith.constant 16 : index
    %c0_44 = arith.constant 0 : index
    %68 = vector.load %arg14[%c16_43, %c0_44] : memref<72x256xf32, #tpu.memory_space<vmem>>, vector<8x256xf32>
    tpu.vector_store %arg14[%c16_43, %c0_44], %67 {strides = array<i32>} : memref<72x256xf32, #tpu.memory_space<vmem>>, vector<8x256xf32>,
    %c1_i32_45 = arith.constant 1 : i32
    %69 = tpu.dynamic_rotate %53 by %c1_i32_45 dim 1 : vector<8x256xf32>, i32 -> vector<8x256xf32>
    %c3_46 = arith.constant 3 : index
    %c0_47 = arith.constant 0 : index
    %70 = vector.load %arg7[%c3_46, %c0_47] : memref<9x256xf32, #tpu.memory_space<vmem>>, vector<1x256xf32>
    %71 = vector.broadcast %70 : vector<1x256xf32> to vector<8x256xf32>
    %72 = arith.mulf %69, %71 : vector<8x256xf32>
    %c24_48 = arith.constant 24 : index
    %c0_49 = arith.constant 0 : index
    %73 = vector.load %arg14[%c24_48, %c0_49] : memref<72x256xf32, #tpu.memory_space<vmem>>, vector<8x256xf32>
    tpu.vector_store %arg14[%c24_48, %c0_49], %72 {strides = array<i32>} : memref<72x256xf32, #tpu.memory_space<vmem>>, vector<8x256xf32>,
    %c4_50 = arith.constant 4 : index
    %c0_51 = arith.constant 0 : index
    %74 = vector.load %arg7[%c4_50, %c0_51] : memref<9x256xf32, #tpu.memory_space<vmem>>, vector<1x256xf32>
    %75 = vector.broadcast %74 : vector<1x256xf32> to vector<8x256xf32>
    %76 = arith.mulf %53, %75 : vector<8x256xf32>
    %c32_52 = arith.constant 32 : index
    %c0_53 = arith.constant 0 : index
    %77 = vector.load %arg14[%c32_52, %c0_53] : memref<72x256xf32, #tpu.memory_space<vmem>>, vector<8x256xf32>
    tpu.vector_store %arg14[%c32_52, %c0_53], %76 {strides = array<i32>} : memref<72x256xf32, #tpu.memory_space<vmem>>, vector<8x256xf32>,
    %c255_i32_54 = arith.constant 255 : i32
    %78 = tpu.dynamic_rotate %53 by %c255_i32_54 dim 1 : vector<8x256xf32>, i32 -> vector<8x256xf32>
    %c5_55 = arith.constant 5 : index
    %c0_56 = arith.constant 0 : index
    %79 = vector.load %arg7[%c5_55, %c0_56] : memref<9x256xf32, #tpu.memory_space<vmem>>, vector<1x256xf32>
    %80 = vector.broadcast %79 : vector<1x256xf32> to vector<8x256xf32>
    %81 = arith.mulf %78, %80 : vector<8x256xf32>
    %c40_57 = arith.constant 40 : index
    %c0_58 = arith.constant 0 : index
    %82 = vector.load %arg14[%c40_57, %c0_58] : memref<72x256xf32, #tpu.memory_space<vmem>>, vector<8x256xf32>
    tpu.vector_store %arg14[%c40_57, %c0_58], %81 {strides = array<i32>} : memref<72x256xf32, #tpu.memory_space<vmem>>, vector<8x256xf32>,
    %c241_i32_59 = arith.constant 241 : i32
    %83 = tpu.dynamic_rotate %53 by %c241_i32_59 dim 1 : vector<8x256xf32>, i32 -> vector<8x256xf32>
    %c6_60 = arith.constant 6 : index
    %c0_61 = arith.constant 0 : index
    %84 = vector.load %arg7[%c6_60, %c0_61] : memref<9x256xf32, #tpu.memory_space<vmem>>, vector<1x256xf32>
    %85 = vector.broadcast %84 : vector<1x256xf32> to vector<8x256xf32>
    %86 = arith.mulf %83, %85 : vector<8x256xf32>
    %c48_62 = arith.constant 48 : index
    %c0_63 = arith.constant 0 : index
    %87 = vector.load %arg14[%c48_62, %c0_63] : memref<72x256xf32, #tpu.memory_space<vmem>>, vector<8x256xf32>
    tpu.vector_store %arg14[%c48_62, %c0_63], %86 {strides = array<i32>} : memref<72x256xf32, #tpu.memory_space<vmem>>, vector<8x256xf32>,
    %c240_i32_64 = arith.constant 240 : i32
    %88 = tpu.dynamic_rotate %53 by %c240_i32_64 dim 1 : vector<8x256xf32>, i32 -> vector<8x256xf32>
    %c7_65 = arith.constant 7 : index
    %c0_66 = arith.constant 0 : index
    %89 = vector.load %arg7[%c7_65, %c0_66] : memref<9x256xf32, #tpu.memory_space<vmem>>, vector<1x256xf32>
    %90 = vector.broadcast %89 : vector<1x256xf32> to vector<8x256xf32>
    %91 = arith.mulf %88, %90 : vector<8x256xf32>
    %c56_67 = arith.constant 56 : index
    %c0_68 = arith.constant 0 : index
    %92 = vector.load %arg14[%c56_67, %c0_68] : memref<72x256xf32, #tpu.memory_space<vmem>>, vector<8x256xf32>
    tpu.vector_store %arg14[%c56_67, %c0_68], %91 {strides = array<i32>} : memref<72x256xf32, #tpu.memory_space<vmem>>, vector<8x256xf32>,
    %c239_i32_69 = arith.constant 239 : i32
    %93 = tpu.dynamic_rotate %53 by %c239_i32_69 dim 1 : vector<8x256xf32>, i32 -> vector<8x256xf32>
    %c8_70 = arith.constant 8 : index
    %c0_71 = arith.constant 0 : index
    %94 = vector.load %arg7[%c8_70, %c0_71] : memref<9x256xf32, #tpu.memory_space<vmem>>, vector<1x256xf32>
    %95 = vector.broadcast %94 : vector<1x256xf32> to vector<8x256xf32>
    %96 = arith.mulf %93, %95 : vector<8x256xf32>
    %c64_72 = arith.constant 64 : index
    %c0_73 = arith.constant 0 : index
    %97 = vector.load %arg14[%c64_72, %c0_73] : memref<72x256xf32, #tpu.memory_space<vmem>>, vector<8x256xf32>
    tpu.vector_store %arg14[%c64_72, %c0_73], %96 {strides = array<i32>} : memref<72x256xf32, #tpu.memory_space<vmem>>, vector<8x256xf32>,
    %c0_74 = arith.constant 0 : index
    %c0_75 = arith.constant 0 : index
    %98 = vector.load %arg5[%c0_74, %c0_75] : memref<8x72xf32, #tpu.memory_space<vmem>>, vector<8x72xf32>
    %c0_76 = arith.constant 0 : index
    %c0_77 = arith.constant 0 : index
    %99 = vector.load %arg14[%c0_76, %c0_77] : memref<72x256xf32, #tpu.memory_space<vmem>>, vector<72x256xf32>
    %cst_78 = arith.constant dense<0.000000e+00> : vector<8x256xf32>
    %100 = tpu.matmul %98, %99, %cst_78 {dimension_numbers = #tpu.dot_dimension_numbers<[1], [0], [0], [1], [0, 0, 1, 1], [], []>} : vector<8x72xf32>, vector<72x256xf32>, vector<8x256xf32> -> vector<8x256xf32>
    %c0_79 = arith.constant 0 : index
    %c0_80 = arith.constant 0 : index
    %101 = vector.load %arg6[%c0_79, %c0_80] : memref<8x1xf32, #tpu.memory_space<vmem>>, vector<8x1xf32>
    %102 = vector.broadcast %101 : vector<8x1xf32> to vector<8x256xf32>
    %103 = arith.addf %100, %102 : vector<8x256xf32>
    %104 = vector.extract_strided_slice %103 {offsets = [0, 0], sizes = [1, 256], strides = [1, 1]} : vector<8x256xf32> to vector<1x256xf32>
    %c0_81 = arith.constant 0 : index
    %c0_82 = arith.constant 0 : index
    %c0_83 = arith.constant 0 : index
    %105 = vector.load %arg12[%c0_81, %c0_82, %c0_83] : memref<1x1x256xf32, #tpu.memory_space<vmem>>, vector<1x1x256xf32>
    %106 = vector.shape_cast %105 : vector<1x1x256xf32> to vector<1x256xf32>
    %107 = vector.shape_cast %104 : vector<1x256xf32> to vector<1x1x256xf32>
    tpu.vector_store %arg12[%c0_81, %c0_82, %c0_83], %107 {strides = array<i32>} : memref<1x1x256xf32, #tpu.memory_space<vmem>>, vector<1x1x256xf32>,
    %c0_84 = arith.constant 0 : index
    %c0_85 = arith.constant 0 : index
    %c0_86 = arith.constant 0 : index
    %108 = vector.load %arg2[%c0_84, %c0_85, %c0_86] : memref<1x1x256xf32, #tpu.memory_space<vmem>>, vector<1x1x256xf32>
    %109 = vector.shape_cast %108 : vector<1x1x256xf32> to vector<1x256xf32>
    %c48_i32 = arith.constant 48 : i32
    %110 = tpu.dynamic_rotate %109 by %c48_i32 dim 1 : vector<1x256xf32>, i32 -> vector<1x256xf32>
    %c0_87 = arith.constant 0 : index
    %c0_88 = arith.constant 0 : index
    %111 = vector.load %arg8[%c0_87, %c0_88] : memref<7x256xf32, #tpu.memory_space<vmem>>, vector<1x256xf32>
    %112 = arith.mulf %110, %111 : vector<1x256xf32>
    %c32_i32 = arith.constant 32 : i32
    %113 = tpu.dynamic_rotate %109 by %c32_i32 dim 1 : vector<1x256xf32>, i32 -> vector<1x256xf32>
    %c1_89 = arith.constant 1 : index
    %c0_90 = arith.constant 0 : index
    %114 = vector.load %arg8[%c1_89, %c0_90] : memref<7x256xf32, #tpu.memory_space<vmem>>, vector<1x256xf32>
    %115 = arith.mulf %113, %114 : vector<1x256xf32>
    %116 = arith.addf %112, %115 : vector<1x256xf32>
    %c16_i32_91 = arith.constant 16 : i32
    %117 = tpu.dynamic_rotate %109 by %c16_i32_91 dim 1 : vector<1x256xf32>, i32 -> vector<1x256xf32>
    %c2_92 = arith.constant 2 : index
    %c0_93 = arith.constant 0 : index
    %118 = vector.load %arg8[%c2_92, %c0_93] : memref<7x256xf32, #tpu.memory_space<vmem>>, vector<1x256xf32>
    %119 = arith.mulf %117, %118 : vector<1x256xf32>
    %120 = arith.addf %116, %119 : vector<1x256xf32>
    %c3_94 = arith.constant 3 : index
    %c0_95 = arith.constant 0 : index
    %121 = vector.load %arg8[%c3_94, %c0_95] : memref<7x256xf32, #tpu.memory_space<vmem>>, vector<1x256xf32>
    %122 = arith.mulf %109, %121 : vector<1x256xf32>
    %123 = arith.addf %120, %122 : vector<1x256xf32>
    %c240_i32_96 = arith.constant 240 : i32
    %124 = tpu.dynamic_rotate %109 by %c240_i32_96 dim 1 : vector<1x256xf32>, i32 -> vector<1x256xf32>
    %c4_97 = arith.constant 4 : index
    %c0_98 = arith.constant 0 : index
    %125 = vector.load %arg8[%c4_97, %c0_98] : memref<7x256xf32, #tpu.memory_space<vmem>>, vector<1x256xf32>
    %126 = arith.mulf %124, %125 : vector<1x256xf32>
    %127 = arith.addf %123, %126 : vector<1x256xf32>
    %c224_i32 = arith.constant 224 : i32
    %128 = tpu.dynamic_rotate %109 by %c224_i32 dim 1 : vector<1x256xf32>, i32 -> vector<1x256xf32>
    %c5_99 = arith.constant 5 : index
    %c0_100 = arith.constant 0 : index
    %129 = vector.load %arg8[%c5_99, %c0_100] : memref<7x256xf32, #tpu.memory_space<vmem>>, vector<1x256xf32>
    %130 = arith.mulf %128, %129 : vector<1x256xf32>
    %131 = arith.addf %127, %130 : vector<1x256xf32>
    %c208_i32 = arith.constant 208 : i32
    %132 = tpu.dynamic_rotate %109 by %c208_i32 dim 1 : vector<1x256xf32>, i32 -> vector<1x256xf32>
    %c6_101 = arith.constant 6 : index
    %c0_102 = arith.constant 0 : index
    %133 = vector.load %arg8[%c6_101, %c0_102] : memref<7x256xf32, #tpu.memory_space<vmem>>, vector<1x256xf32>
    %134 = arith.mulf %132, %133 : vector<1x256xf32>
    %135 = arith.addf %131, %134 : vector<1x256xf32>
    %c3_i32 = arith.constant 3 : i32
    %136 = tpu.dynamic_rotate %135 by %c3_i32 dim 1 : vector<1x256xf32>, i32 -> vector<1x256xf32>
    %c0_103 = arith.constant 0 : index
    %c0_104 = arith.constant 0 : index
    %137 = vector.load %arg9[%c0_103, %c0_104] : memref<7x256xf32, #tpu.memory_space<vmem>>, vector<1x256xf32>
    %138 = arith.mulf %136, %137 : vector<1x256xf32>
    %c2_i32 = arith.constant 2 : i32
    %139 = tpu.dynamic_rotate %135 by %c2_i32 dim 1 : vector<1x256xf32>, i32 -> vector<1x256xf32>
    %c1_105 = arith.constant 1 : index
    %c0_106 = arith.constant 0 : index
    %140 = vector.load %arg9[%c1_105, %c0_106] : memref<7x256xf32, #tpu.memory_space<vmem>>, vector<1x256xf32>
    %141 = arith.mulf %139, %140 : vector<1x256xf32>
    %142 = arith.addf %138, %141 : vector<1x256xf32>
    %c1_i32_107 = arith.constant 1 : i32
    %143 = tpu.dynamic_rotate %135 by %c1_i32_107 dim 1 : vector<1x256xf32>, i32 -> vector<1x256xf32>
    %c2_108 = arith.constant 2 : index
    %c0_109 = arith.constant 0 : index
    %144 = vector.load %arg9[%c2_108, %c0_109] : memref<7x256xf32, #tpu.memory_space<vmem>>, vector<1x256xf32>
    %145 = arith.mulf %143, %144 : vector<1x256xf32>
    %146 = arith.addf %142, %145 : vector<1x256xf32>
    %c3_110 = arith.constant 3 : index
    %c0_111 = arith.constant 0 : index
    %147 = vector.load %arg9[%c3_110, %c0_111] : memref<7x256xf32, #tpu.memory_space<vmem>>, vector<1x256xf32>
    %148 = arith.mulf %135, %147 : vector<1x256xf32>
    %149 = arith.addf %146, %148 : vector<1x256xf32>
    %c255_i32_112 = arith.constant 255 : i32
    %150 = tpu.dynamic_rotate %135 by %c255_i32_112 dim 1 : vector<1x256xf32>, i32 -> vector<1x256xf32>
    %c4_113 = arith.constant 4 : index
    %c0_114 = arith.constant 0 : index
    %151 = vector.load %arg9[%c4_113, %c0_114] : memref<7x256xf32, #tpu.memory_space<vmem>>, vector<1x256xf32>
    %152 = arith.mulf %150, %151 : vector<1x256xf32>
    %153 = arith.addf %149, %152 : vector<1x256xf32>
    %c254_i32 = arith.constant 254 : i32
    %154 = tpu.dynamic_rotate %135 by %c254_i32 dim 1 : vector<1x256xf32>, i32 -> vector<1x256xf32>
    %c5_115 = arith.constant 5 : index
    %c0_116 = arith.constant 0 : index
    %155 = vector.load %arg9[%c5_115, %c0_116] : memref<7x256xf32, #tpu.memory_space<vmem>>, vector<1x256xf32>
    %156 = arith.mulf %154, %155 : vector<1x256xf32>
    %157 = arith.addf %153, %156 : vector<1x256xf32>
    %c253_i32 = arith.constant 253 : i32
    %158 = tpu.dynamic_rotate %135 by %c253_i32 dim 1 : vector<1x256xf32>, i32 -> vector<1x256xf32>
    %c6_117 = arith.constant 6 : index
    %c0_118 = arith.constant 0 : index
    %159 = vector.load %arg9[%c6_117, %c0_118] : memref<7x256xf32, #tpu.memory_space<vmem>>, vector<1x256xf32>
    %160 = arith.mulf %158, %159 : vector<1x256xf32>
    %161 = arith.addf %157, %160 : vector<1x256xf32>
    %162 = arith.subf %104, %161 : vector<1x256xf32>
    %163 = arith.mulf %162, %162 : vector<1x256xf32>
    %164 = vector.shape_cast %163 : vector<1x256xf32> to vector<1x1x256xf32>
    %cst_119 = arith.constant dense<0.000000e+00> : vector<1xf32>
    %165 = vector.multi_reduction <add>, %164, %cst_119 [1, 2] : vector<1x1x256xf32> to vector<1xf32>
    %166 = vector.shape_cast %165 : vector<1xf32> to vector<1x1x1xf32>
    %167 = vector.extract %166[0, 0, 0] : f32 from vector<1x1x1xf32>
    %168 = vector.broadcast %167 : f32 to vector<1x1xf32>
    %c0_120 = arith.constant 0 : index
    %c0_121 = arith.constant 0 : index
    %169 = vector.load %arg14[%c0_120, %c0_121] : memref<72x256xf32, #tpu.memory_space<vmem>>, vector<1x256xf32>
    tpu.vector_store %arg14[%c0_120, %c0_121], %104 {strides = array<i32>} : memref<72x256xf32, #tpu.memory_space<vmem>>, vector<1x256xf32>,
    %c1_122 = arith.constant 1 : index
    %c0_123 = arith.constant 0 : index
    %170 = vector.load %arg14[%c1_122, %c0_123] : memref<72x256xf32, #tpu.memory_space<vmem>>, vector<1x256xf32>
    tpu.vector_store %arg14[%c1_122, %c0_123], %161 {strides = array<i32>} : memref<72x256xf32, #tpu.memory_space<vmem>>, vector<1x256xf32>,
    %171 = arith.mulf %104, %104 : vector<1x256xf32>
    %c2_124 = arith.constant 2 : index
    %c0_125 = arith.constant 0 : index
    %172 = vector.load %arg14[%c2_124, %c0_125] : memref<72x256xf32, #tpu.memory_space<vmem>>, vector<1x256xf32>
    tpu.vector_store %arg14[%c2_124, %c0_125], %171 {strides = array<i32>} : memref<72x256xf32, #tpu.memory_space<vmem>>, vector<1x256xf32>,
    %173 = arith.mulf %161, %161 : vector<1x256xf32>
    %c3_126 = arith.constant 3 : index
    %c0_127 = arith.constant 0 : index
    %174 = vector.load %arg14[%c3_126, %c0_127] : memref<72x256xf32, #tpu.memory_space<vmem>>, vector<1x256xf32>
    tpu.vector_store %arg14[%c3_126, %c0_127], %173 {strides = array<i32>} : memref<72x256xf32, #tpu.memory_space<vmem>>, vector<1x256xf32>,
    %175 = arith.mulf %104, %161 : vector<1x256xf32>
    %c4_128 = arith.constant 4 : index
    %c0_129 = arith.constant 0 : index
    %176 = vector.load %arg14[%c4_128, %c0_129] : memref<72x256xf32, #tpu.memory_space<vmem>>, vector<1x256xf32>
    tpu.vector_store %arg14[%c4_128, %c0_129], %175 {strides = array<i32>} : memref<72x256xf32, #tpu.memory_space<vmem>>, vector<1x256xf32>,
    %c0_130 = arith.constant 0 : index
    %c0_131 = arith.constant 0 : index
    %177 = vector.load %arg14[%c0_130, %c0_131] : memref<72x256xf32, #tpu.memory_space<vmem>>, vector<8x256xf32>
    %c80_i32 = arith.constant 80 : i32
    %178 = tpu.dynamic_rotate %177 by %c80_i32 dim 1 : vector<8x256xf32>, i32 -> vector<8x256xf32>
    %c0_132 = arith.constant 0 : index
    %c0_133 = arith.constant 0 : index
    %179 = vector.load %arg10[%c0_132, %c0_133] : memref<11x256xf32, #tpu.memory_space<vmem>>, vector<1x256xf32>
    %180 = vector.broadcast %179 : vector<1x256xf32> to vector<8x256xf32>
    %181 = arith.mulf %178, %180 : vector<8x256xf32>
    %c64_i32 = arith.constant 64 : i32
    %182 = tpu.dynamic_rotate %177 by %c64_i32 dim 1 : vector<8x256xf32>, i32 -> vector<8x256xf32>
    %c1_134 = arith.constant 1 : index
    %c0_135 = arith.constant 0 : index
    %183 = vector.load %arg10[%c1_134, %c0_135] : memref<11x256xf32, #tpu.memory_space<vmem>>, vector<1x256xf32>
    %184 = vector.broadcast %183 : vector<1x256xf32> to vector<8x256xf32>
    %185 = arith.mulf %182, %184 : vector<8x256xf32>
    %186 = arith.addf %181, %185 : vector<8x256xf32>
    %c48_i32_136 = arith.constant 48 : i32
    %187 = tpu.dynamic_rotate %177 by %c48_i32_136 dim 1 : vector<8x256xf32>, i32 -> vector<8x256xf32>
    %c2_137 = arith.constant 2 : index
    %c0_138 = arith.constant 0 : index
    %188 = vector.load %arg10[%c2_137, %c0_138] : memref<11x256xf32, #tpu.memory_space<vmem>>, vector<1x256xf32>
    %189 = vector.broadcast %188 : vector<1x256xf32> to vector<8x256xf32>
    %190 = arith.mulf %187, %189 : vector<8x256xf32>
    %191 = arith.addf %186, %190 : vector<8x256xf32>
    %c32_i32_139 = arith.constant 32 : i32
    %192 = tpu.dynamic_rotate %177 by %c32_i32_139 dim 1 : vector<8x256xf32>, i32 -> vector<8x256xf32>
    %c3_140 = arith.constant 3 : index
    %c0_141 = arith.constant 0 : index
    %193 = vector.load %arg10[%c3_140, %c0_141] : memref<11x256xf32, #tpu.memory_space<vmem>>, vector<1x256xf32>
    %194 = vector.broadcast %193 : vector<1x256xf32> to vector<8x256xf32>
    %195 = arith.mulf %192, %194 : vector<8x256xf32>
    %196 = arith.addf %191, %195 : vector<8x256xf32>
    %c16_i32_142 = arith.constant 16 : i32
    %197 = tpu.dynamic_rotate %177 by %c16_i32_142 dim 1 : vector<8x256xf32>, i32 -> vector<8x256xf32>
    %c4_143 = arith.constant 4 : index
    %c0_144 = arith.constant 0 : index
    %198 = vector.load %arg10[%c4_143, %c0_144] : memref<11x256xf32, #tpu.memory_space<vmem>>, vector<1x256xf32>
    %199 = vector.broadcast %198 : vector<1x256xf32> to vector<8x256xf32>
    %200 = arith.mulf %197, %199 : vector<8x256xf32>
    %201 = arith.addf %196, %200 : vector<8x256xf32>
    %c5_145 = arith.constant 5 : index
    %c0_146 = arith.constant 0 : index
    %202 = vector.load %arg10[%c5_145, %c0_146] : memref<11x256xf32, #tpu.memory_space<vmem>>, vector<1x256xf32>
    %203 = vector.broadcast %202 : vector<1x256xf32> to vector<8x256xf32>
    %204 = arith.mulf %177, %203 : vector<8x256xf32>
    %205 = arith.addf %201, %204 : vector<8x256xf32>
    %c240_i32_147 = arith.constant 240 : i32
    %206 = tpu.dynamic_rotate %177 by %c240_i32_147 dim 1 : vector<8x256xf32>, i32 -> vector<8x256xf32>
    %c6_148 = arith.constant 6 : index
    %c0_149 = arith.constant 0 : index
    %207 = vector.load %arg10[%c6_148, %c0_149] : memref<11x256xf32, #tpu.memory_space<vmem>>, vector<1x256xf32>
    %208 = vector.broadcast %207 : vector<1x256xf32> to vector<8x256xf32>
    %209 = arith.mulf %206, %208 : vector<8x256xf32>
    %210 = arith.addf %205, %209 : vector<8x256xf32>
    %c224_i32_150 = arith.constant 224 : i32
    %211 = tpu.dynamic_rotate %177 by %c224_i32_150 dim 1 : vector<8x256xf32>, i32 -> vector<8x256xf32>
    %c7_151 = arith.constant 7 : index
    %c0_152 = arith.constant 0 : index
    %212 = vector.load %arg10[%c7_151, %c0_152] : memref<11x256xf32, #tpu.memory_space<vmem>>, vector<1x256xf32>
    %213 = vector.broadcast %212 : vector<1x256xf32> to vector<8x256xf32>
    %214 = arith.mulf %211, %213 : vector<8x256xf32>
    %215 = arith.addf %210, %214 : vector<8x256xf32>
    %c208_i32_153 = arith.constant 208 : i32
    %216 = tpu.dynamic_rotate %177 by %c208_i32_153 dim 1 : vector<8x256xf32>, i32 -> vector<8x256xf32>
    %c8_154 = arith.constant 8 : index
    %c0_155 = arith.constant 0 : index
    %217 = vector.load %arg10[%c8_154, %c0_155] : memref<11x256xf32, #tpu.memory_space<vmem>>, vector<1x256xf32>
    %218 = vector.broadcast %217 : vector<1x256xf32> to vector<8x256xf32>
    %219 = arith.mulf %216, %218 : vector<8x256xf32>
    %220 = arith.addf %215, %219 : vector<8x256xf32>
    %c192_i32 = arith.constant 192 : i32
    %221 = tpu.dynamic_rotate %177 by %c192_i32 dim 1 : vector<8x256xf32>, i32 -> vector<8x256xf32>
    %c9 = arith.constant 9 : index
    %c0_156 = arith.constant 0 : index
    %222 = vector.load %arg10[%c9, %c0_156] : memref<11x256xf32, #tpu.memory_space<vmem>>, vector<1x256xf32>
    %223 = vector.broadcast %222 : vector<1x256xf32> to vector<8x256xf32>
    %224 = arith.mulf %221, %223 : vector<8x256xf32>
    %225 = arith.addf %220, %224 : vector<8x256xf32>
    %c176_i32 = arith.constant 176 : i32
    %226 = tpu.dynamic_rotate %177 by %c176_i32 dim 1 : vector<8x256xf32>, i32 -> vector<8x256xf32>
    %c10 = arith.constant 10 : index
    %c0_157 = arith.constant 0 : index
    %227 = vector.load %arg10[%c10, %c0_157] : memref<11x256xf32, #tpu.memory_space<vmem>>, vector<1x256xf32>
    %228 = vector.broadcast %227 : vector<1x256xf32> to vector<8x256xf32>
    %229 = arith.mulf %226, %228 : vector<8x256xf32>
    %230 = arith.addf %225, %229 : vector<8x256xf32>
    %c5_i32 = arith.constant 5 : i32
    %231 = tpu.dynamic_rotate %230 by %c5_i32 dim 1 : vector<8x256xf32>, i32 -> vector<8x256xf32>
    %c0_158 = arith.constant 0 : index
    %c0_159 = arith.constant 0 : index
    %232 = vector.load %arg11[%c0_158, %c0_159] : memref<11x256xf32, #tpu.memory_space<vmem>>, vector<1x256xf32>
    %233 = vector.broadcast %232 : vector<1x256xf32> to vector<8x256xf32>
    %234 = arith.mulf %231, %233 : vector<8x256xf32>
    %c4_i32 = arith.constant 4 : i32
    %235 = tpu.dynamic_rotate %230 by %c4_i32 dim 1 : vector<8x256xf32>, i32 -> vector<8x256xf32>
    %c1_160 = arith.constant 1 : index
    %c0_161 = arith.constant 0 : index
    %236 = vector.load %arg11[%c1_160, %c0_161] : memref<11x256xf32, #tpu.memory_space<vmem>>, vector<1x256xf32>
    %237 = vector.broadcast %236 : vector<1x256xf32> to vector<8x256xf32>
    %238 = arith.mulf %235, %237 : vector<8x256xf32>
    %239 = arith.addf %234, %238 : vector<8x256xf32>
    %c3_i32_162 = arith.constant 3 : i32
    %240 = tpu.dynamic_rotate %230 by %c3_i32_162 dim 1 : vector<8x256xf32>, i32 -> vector<8x256xf32>
    %c2_163 = arith.constant 2 : index
    %c0_164 = arith.constant 0 : index
    %241 = vector.load %arg11[%c2_163, %c0_164] : memref<11x256xf32, #tpu.memory_space<vmem>>, vector<1x256xf32>
    %242 = vector.broadcast %241 : vector<1x256xf32> to vector<8x256xf32>
    %243 = arith.mulf %240, %242 : vector<8x256xf32>
    %244 = arith.addf %239, %243 : vector<8x256xf32>
    %c2_i32_165 = arith.constant 2 : i32
    %245 = tpu.dynamic_rotate %230 by %c2_i32_165 dim 1 : vector<8x256xf32>, i32 -> vector<8x256xf32>
    %c3_166 = arith.constant 3 : index
    %c0_167 = arith.constant 0 : index
    %246 = vector.load %arg11[%c3_166, %c0_167] : memref<11x256xf32, #tpu.memory_space<vmem>>, vector<1x256xf32>
    %247 = vector.broadcast %246 : vector<1x256xf32> to vector<8x256xf32>
    %248 = arith.mulf %245, %247 : vector<8x256xf32>
    %249 = arith.addf %244, %248 : vector<8x256xf32>
    %c1_i32_168 = arith.constant 1 : i32
    %250 = tpu.dynamic_rotate %230 by %c1_i32_168 dim 1 : vector<8x256xf32>, i32 -> vector<8x256xf32>
    %c4_169 = arith.constant 4 : index
    %c0_170 = arith.constant 0 : index
    %251 = vector.load %arg11[%c4_169, %c0_170] : memref<11x256xf32, #tpu.memory_space<vmem>>, vector<1x256xf32>
    %252 = vector.broadcast %251 : vector<1x256xf32> to vector<8x256xf32>
    %253 = arith.mulf %250, %252 : vector<8x256xf32>
    %254 = arith.addf %249, %253 : vector<8x256xf32>
    %c5_171 = arith.constant 5 : index
    %c0_172 = arith.constant 0 : index
    %255 = vector.load %arg11[%c5_171, %c0_172] : memref<11x256xf32, #tpu.memory_space<vmem>>, vector<1x256xf32>
    %256 = vector.broadcast %255 : vector<1x256xf32> to vector<8x256xf32>
    %257 = arith.mulf %230, %256 : vector<8x256xf32>
    %258 = arith.addf %254, %257 : vector<8x256xf32>
    %c255_i32_173 = arith.constant 255 : i32
    %259 = tpu.dynamic_rotate %230 by %c255_i32_173 dim 1 : vector<8x256xf32>, i32 -> vector<8x256xf32>
    %c6_174 = arith.constant 6 : index
    %c0_175 = arith.constant 0 : index
    %260 = vector.load %arg11[%c6_174, %c0_175] : memref<11x256xf32, #tpu.memory_space<vmem>>, vector<1x256xf32>
    %261 = vector.broadcast %260 : vector<1x256xf32> to vector<8x256xf32>
    %262 = arith.mulf %259, %261 : vector<8x256xf32>
    %263 = arith.addf %258, %262 : vector<8x256xf32>
    %c254_i32_176 = arith.constant 254 : i32
    %264 = tpu.dynamic_rotate %230 by %c254_i32_176 dim 1 : vector<8x256xf32>, i32 -> vector<8x256xf32>
    %c7_177 = arith.constant 7 : index
    %c0_178 = arith.constant 0 : index
    %265 = vector.load %arg11[%c7_177, %c0_178] : memref<11x256xf32, #tpu.memory_space<vmem>>, vector<1x256xf32>
    %266 = vector.broadcast %265 : vector<1x256xf32> to vector<8x256xf32>
    %267 = arith.mulf %264, %266 : vector<8x256xf32>
    %268 = arith.addf %263, %267 : vector<8x256xf32>
    %c253_i32_179 = arith.constant 253 : i32
    %269 = tpu.dynamic_rotate %230 by %c253_i32_179 dim 1 : vector<8x256xf32>, i32 -> vector<8x256xf32>
    %c8_180 = arith.constant 8 : index
    %c0_181 = arith.constant 0 : index
    %270 = vector.load %arg11[%c8_180, %c0_181] : memref<11x256xf32, #tpu.memory_space<vmem>>, vector<1x256xf32>
    %271 = vector.broadcast %270 : vector<1x256xf32> to vector<8x256xf32>
    %272 = arith.mulf %269, %271 : vector<8x256xf32>
    %273 = arith.addf %268, %272 : vector<8x256xf32>
    %c252_i32 = arith.constant 252 : i32
    %274 = tpu.dynamic_rotate %230 by %c252_i32 dim 1 : vector<8x256xf32>, i32 -> vector<8x256xf32>
    %c9_182 = arith.constant 9 : index
    %c0_183 = arith.constant 0 : index
    %275 = vector.load %arg11[%c9_182, %c0_183] : memref<11x256xf32, #tpu.memory_space<vmem>>, vector<1x256xf32>
    %276 = vector.broadcast %275 : vector<1x256xf32> to vector<8x256xf32>
    %277 = arith.mulf %274, %276 : vector<8x256xf32>
    %278 = arith.addf %273, %277 : vector<8x256xf32>
    %c251_i32 = arith.constant 251 : i32
    %279 = tpu.dynamic_rotate %230 by %c251_i32 dim 1 : vector<8x256xf32>, i32 -> vector<8x256xf32>
    %c10_184 = arith.constant 10 : index
    %c0_185 = arith.constant 0 : index
    %280 = vector.load %arg11[%c10_184, %c0_185] : memref<11x256xf32, #tpu.memory_space<vmem>>, vector<1x256xf32>
    %281 = vector.broadcast %280 : vector<1x256xf32> to vector<8x256xf32>
    %282 = arith.mulf %279, %281 : vector<8x256xf32>
    %283 = arith.addf %278, %282 : vector<8x256xf32>
    %284 = vector.extract_strided_slice %283 {offsets = [0, 0], sizes = [1, 256], strides = [1, 1]} : vector<8x256xf32> to vector<1x256xf32>
    %285 = vector.extract_strided_slice %283 {offsets = [1, 0], sizes = [1, 256], strides = [1, 1]} : vector<8x256xf32> to vector<1x256xf32>
    %286 = vector.extract_strided_slice %283 {offsets = [2, 0], sizes = [1, 256], strides = [1, 1]} : vector<8x256xf32> to vector<1x256xf32>
    %287 = vector.extract_strided_slice %283 {offsets = [3, 0], sizes = [1, 256], strides = [1, 1]} : vector<8x256xf32> to vector<1x256xf32>
    %288 = vector.extract_strided_slice %283 {offsets = [4, 0], sizes = [1, 256], strides = [1, 1]} : vector<8x256xf32> to vector<1x256xf32>
    %289 = arith.mulf %284, %284 : vector<1x256xf32>
    %290 = arith.mulf %285, %285 : vector<1x256xf32>
    %291 = arith.mulf %284, %285 : vector<1x256xf32>
    %292 = arith.subf %286, %289 : vector<1x256xf32>
    %293 = arith.subf %287, %290 : vector<1x256xf32>
    %294 = arith.subf %288, %291 : vector<1x256xf32>
    %cst_186 = arith.constant 2.000000e+00 : f32
    %295 = vector.broadcast %cst_186 : f32 to vector<1x256xf32>
    %296 = arith.mulf %295, %291 : vector<1x256xf32>
    %cst_187 = arith.constant 9.99999974E-5 : f32
    %297 = vector.broadcast %cst_187 : f32 to vector<1x256xf32>
    %298 = arith.addf %296, %297 : vector<1x256xf32>
    %cst_188 = arith.constant 2.000000e+00 : f32
    %299 = vector.broadcast %cst_188 : f32 to vector<1x256xf32>
    %300 = arith.mulf %299, %294 : vector<1x256xf32>
    %cst_189 = arith.constant 8.99999984E-4 : f32
    %301 = vector.broadcast %cst_189 : f32 to vector<1x256xf32>
    %302 = arith.addf %300, %301 : vector<1x256xf32>
    %303 = arith.mulf %298, %302 : vector<1x256xf32>
    %304 = arith.addf %289, %290 : vector<1x256xf32>
    %cst_190 = arith.constant 9.99999974E-5 : f32
    %305 = vector.broadcast %cst_190 : f32 to vector<1x256xf32>
    %306 = arith.addf %304, %305 : vector<1x256xf32>
    %307 = arith.addf %292, %293 : vector<1x256xf32>
    %cst_191 = arith.constant 8.99999984E-4 : f32
    %308 = vector.broadcast %cst_191 : f32 to vector<1x256xf32>
    %309 = arith.addf %307, %308 : vector<1x256xf32>
    %310 = arith.mulf %306, %309 : vector<1x256xf32>
    %311 = arith.divf %303, %310 : vector<1x256xf32>
    %312 = vector.shape_cast %311 : vector<1x256xf32> to vector<1x1x256xf32>
    %cst_192 = arith.constant dense<0.000000e+00> : vector<1xf32>
    %313 = vector.multi_reduction <add>, %312, %cst_192 [1, 2] : vector<1x1x256xf32> to vector<1xf32>
    %314 = vector.shape_cast %313 : vector<1xf32> to vector<1x1x1xf32>
    %315 = vector.extract %314[0, 0, 0] : f32 from vector<1x1x1xf32>
    %316 = vector.broadcast %315 : f32 to vector<1x1xf32>
    %317 = vector.shape_cast %168 : vector<1x1xf32> to vector<1x1xf32>
    %318 = vector.broadcast %317 : vector<1x1xf32> to vector<1x128xf32>
    %c0_193 = arith.constant 0 : index
    %c0_194 = arith.constant 0 : index
    %c0_195 = arith.constant 0 : index
    %319 = vector.load %arg13[%c0_193, %c0_194, %c0_195] : memref<1x2x128xf32, #tpu.memory_space<vmem>>, vector<1x1x128xf32>
    %320 = vector.shape_cast %319 : vector<1x1x128xf32> to vector<1x128xf32>
    %321 = vector.shape_cast %318 : vector<1x128xf32> to vector<1x1x128xf32>
    tpu.vector_store %arg13[%c0_193, %c0_194, %c0_195], %321 {strides = array<i32>} : memref<1x2x128xf32, #tpu.memory_space<vmem>>, vector<1x1x128xf32>,
    %322 = vector.shape_cast %316 : vector<1x1xf32> to vector<1x1xf32>
    %323 = vector.broadcast %322 : vector<1x1xf32> to vector<1x128xf32>
    %c0_196 = arith.constant 0 : index
    %c1_197 = arith.constant 1 : index
    %c0_198 = arith.constant 0 : index
    %324 = vector.load %arg13[%c0_196, %c1_197, %c0_198] : memref<1x2x128xf32, #tpu.memory_space<vmem>>, vector<1x1x128xf32>
    %325 = vector.shape_cast %324 : vector<1x1x128xf32> to vector<1x128xf32>
    %326 = vector.shape_cast %323 : vector<1x128xf32> to vector<1x1x128xf32>
    tpu.vector_store %arg13[%c0_196, %c1_197, %c0_198], %326 {strides = array<i32>} : memref<1x2x128xf32, #tpu.memory_space<vmem>>, vector<1x1x128xf32>,
    return
  }
  func.func @transform_0(%arg0: i32) -> (i32, i32, i32) {
    %c0_i32 = arith.constant 0 : i32
    %c0_i32_0 = arith.constant 0 : i32
    %c0_i32_1 = arith.constant 0 : i32
    return %arg0, %c0_i32, %c0_i32_0 : i32, i32, i32
  }
  func.func @transform_1(%arg0: i32) -> (i32, i32, i32) {
    %c0_i32 = arith.constant 0 : i32
    %c0_i32_0 = arith.constant 0 : i32
    %c0_i32_1 = arith.constant 0 : i32
    return %arg0, %c0_i32, %c0_i32_0 : i32, i32, i32
  }
  func.func @transform_2(%arg0: i32) -> (i32, i32) {
    %c0_i32 = arith.constant 0 : i32
    %c0_i32_0 = arith.constant 0 : i32
    %c0_i32_1 = arith.constant 0 : i32
    return %c0_i32, %c0_i32_0 : i32, i32
  }
  func.func @transform_3(%arg0: i32) -> (i32, i32) {
    %c0_i32 = arith.constant 0 : i32
    %c0_i32_0 = arith.constant 0 : i32
    %c0_i32_1 = arith.constant 0 : i32
    return %c0_i32, %c0_i32_0 : i32, i32
  }
  func.func @transform_4(%arg0: i32) -> (i32, i32) {
    %c0_i32 = arith.constant 0 : i32
    %c0_i32_0 = arith.constant 0 : i32
    %c0_i32_1 = arith.constant 0 : i32
    return %c0_i32, %c0_i32_0 : i32, i32
  }
  func.func @transform_5(%arg0: i32) -> (i32, i32) {
    %c0_i32 = arith.constant 0 : i32
    %c0_i32_0 = arith.constant 0 : i32
    %c0_i32_1 = arith.constant 0 : i32
    return %c0_i32, %c0_i32_0 : i32, i32
  }
  func.func @transform_6(%arg0: i32) -> (i32, i32) {
    %c0_i32 = arith.constant 0 : i32
    %c0_i32_0 = arith.constant 0 : i32
    %c0_i32_1 = arith.constant 0 : i32
    return %c0_i32, %c0_i32_0 : i32, i32
  }
  func.func @transform_7(%arg0: i32) -> (i32, i32) {
    %c0_i32 = arith.constant 0 : i32
    %c0_i32_0 = arith.constant 0 : i32
    %c0_i32_1 = arith.constant 0 : i32
    return %c0_i32, %c0_i32_0 : i32, i32
  }
  func.func @transform_8(%arg0: i32) -> (i32, i32) {
    %c0_i32 = arith.constant 0 : i32
    %c0_i32_0 = arith.constant 0 : i32
    %c0_i32_1 = arith.constant 0 : i32
    return %c0_i32, %c0_i32_0 : i32, i32
  }
  func.func @transform_9(%arg0: i32) -> (i32, i32) {
    %c0_i32 = arith.constant 0 : i32
    %c0_i32_0 = arith.constant 0 : i32
    %c0_i32_1 = arith.constant 0 : i32
    return %c0_i32, %c0_i32_0 : i32, i32
  }
  func.func @transform_10(%arg0: i32) -> (i32, i32) {
    %c0_i32 = arith.constant 0 : i32
    %c0_i32_0 = arith.constant 0 : i32
    %c0_i32_1 = arith.constant 0 : i32
    return %c0_i32, %c0_i32_0 : i32, i32
  }
  func.func @transform_11(%arg0: i32) -> (i32, i32, i32) {
    %c0_i32 = arith.constant 0 : i32
    %c0_i32_0 = arith.constant 0 : i32
    %c0_i32_1 = arith.constant 0 : i32
    return %arg0, %c0_i32, %c0_i32_0 : i32, i32, i32
  }
  func.func @transform_12(%arg0: i32) -> (i32, i32, i32) {
    %c0_i32 = arith.constant 0 : i32
    %c0_i32_0 = arith.constant 0 : i32
    %c0_i32_1 = arith.constant 0 : i32
    return %arg0, %c0_i32, %c0_i32_0 : i32, i32, i32
  }
}

</mosaic_0001>

<llo_original>
// kernel: tpu_custom_call.1
$region0: #{tpu_custom_call.1}
  #allocation0 [shape = 'u32[]', space=smem, size = 0x4, offset = 0x4, fixed_abs, tag = 'smem constant byte address 0x4 - core index']
  #allocation1 [shape = 'u32[144,128]{1,0:T(1,128)}', space=vmem, size = 0x12000, scoped, tag = 'internal scratch']
  #allocation2 [shape = 'f32[72,256]{1,0:T(8,128)}', space=vmem, size = 0x12000, scoped, tag = 'scratch operand']
  %s0 = inlined_call_operand.hbm [shape: f32[2,8,256], index: 0, kind: input, shape index: {}]
  %s1 = inlined_call_operand.hbm [shape: f32[2,1,256], index: 1, kind: input, shape index: {}]
  %s2 = inlined_call_operand.hbm [shape: f32[8,72], index: 2, kind: input, shape index: {}]
  %s3 = inlined_call_operand.vmem [shape: f32[8,1], index: 3, kind: input, shape index: {}]
  %s4 = inlined_call_operand.hbm [shape: f32[8,72], index: 4, kind: input, shape index: {}]
  %s5 = inlined_call_operand.vmem [shape: f32[8,1], index: 5, kind: input, shape index: {}]
  %s6 = inlined_call_operand.vmem [shape: f32[9,256], index: 6, kind: input, shape index: {}]
  %s7 = inlined_call_operand.hbm [shape: f32[7,256], index: 7, kind: input, shape index: {}]
  %s8 = inlined_call_operand.vmem [shape: f32[7,256], index: 8, kind: input, shape index: {}]
  %s9 = inlined_call_operand.hbm [shape: f32[11,256], index: 9, kind: input, shape index: {}]
  %s10 = inlined_call_operand.hbm [shape: f32[11,256], index: 10, kind: input, shape index: {}]
  %s11 = inlined_call_operand.hbm [shape: f32[2,1,256], index: 11, kind: output, shape index: {0}]
  %s12 = inlined_call_operand.hbm [shape: f32[2,2,128], index: 12, kind: output, shape index: {1}]
  %13 = xla_tuple %s11, %s12
  %s14 = sld [smem:[#allocation0]]
  $region113: #{tpu_custom_call.1} parent=0
    _
  %s16 = ssub.s32 1, %s14
  %s17 = scalar_select 0, %s16, %s14
  $region1: #{tpu_custom_call.1} parent=0
    #allocation3 [shape = 'u8[16384]{0}', space=vmem, size = 0x4000, scoped, tag = 'input window, operand 0']
    #allocation4 [shape = 's32[2]{0}', space=sflag, size = 0x8, scoped, tag = 'scoped memory for tpu_custom_call.1']
    #allocation5 [shape = 's32[2]{0}', space=sflag, size = 0x8, scoped, tag = 'scoped memory for tpu_custom_call.1']
    #allocation6 [shape = 'u8[2048]{0}', space=vmem, size = 0x800, scoped, tag = 'input window, operand 1']
    #allocation7 [shape = 's32[2]{0}', space=sflag, size = 0x8, scoped, tag = 'scoped memory for tpu_custom_call.1']
    #allocation8 [shape = 'u8[4096]{0}', space=vmem, size = 0x1000, scoped, tag = 'input window, operand 2, single buffered']
    #allocation9 [shape = 'u8[4096]{0}', space=vmem, size = 0x1000, scoped, tag = 'input window, operand 4, single buffered']
    #allocation10 [shape = 's32[1]{0}', space=sflag, size = 0x4, scoped, tag = 'scoped memory for tpu_custom_call.1']
    #allocation11 [shape = 'u8[8192]{0}', space=vmem, size = 0x2000, scoped, tag = 'input window, operand 7, single buffered']
    #allocation12 [shape = 'u8[16384]{0}', space=vmem, size = 0x4000, scoped, tag = 'input window, operand 9, single buffered']
    #allocation13 [shape = 's32[1]{0}', space=sflag, size = 0x4, scoped, tag = 'scoped memory for tpu_custom_call.1']
    #allocation14 [shape = 'u8[16384]{0}', space=vmem, size = 0x4000, scoped, tag = 'input window, operand 10, single buffered']
    #allocation15 [shape = 'u8[2048]{0}', space=vmem, size = 0x800, scoped, tag = 'output window, operand 0']
    #allocation16 [shape = 'u8[2048]{0}', space=vmem, size = 0x800, scoped, tag = 'output window, operand 1']
    #allocation17 [shape = 's32[2]{0}', space=sflag, size = 0x8, scoped, tag = 'scoped memory for tpu_custom_call.1']
    %18 = vsyncpa [#allocation4], 0
    %s19 = scalar_lea.sflag [#allocation4], 1
    %20 = vsyncpa %s19, 0
    %21 = vsyncpa [#allocation7], 0
    %s22 = scalar_lea.sflag [#allocation7], 1
    %23 = vsyncpa %s22, 0
    %24 = vsyncpa [#allocation10], 0
    %25 = vsyncpa [#allocation13], 0
    %26 = vsyncpa [#allocation5], 0
    %s27 = scalar_lea.sflag [#allocation5], 1
    %28 = vsyncpa %s27, 0
    %29 = vsyncpa [#allocation17], 0
    %s30 = scalar_lea.sflag [#allocation17], 1
    %31 = vsyncpa %s30, 0
    loop: start=0, step=1, limit=4
    $region2: #{tpu_custom_call.1} parent=1 // loop_pre_header
      _
    $region3: #{tpu_custom_call.1} parent=1 // loop_header
      %s33 = sphi 0, %s37
      %p34 = scmp.ge.s32.totalorder %s33, 4
      %s43 = sphi 0, %s45
      %s46 = sphi 0, %s43
      %s47 = sphi 0, %s46
      %s63 = sphi 0, %s47
      %s69 = sphi 0, %s71
      %s72 = sphi 0, %s69
      %s73 = sphi 0, %s72
      %s89 = sphi 0, %s73
      %s93 = sphi 0, %s93
      %s95 = sphi 0, %s93
      %s96 = sphi 0, %s95
      %s110 = sphi 0, %s96
      %s114 = sphi 0, %s114
      %s116 = sphi 0, %s114
      %s117 = sphi 0, %s116
      %s131 = sphi 0, %s117
      %s135 = sphi 0, %s135
      %s137 = sphi 0, %s135
      %s138 = sphi 0, %s137
      %s152 = sphi 0, %s138
      %s156 = sphi 0, %s156
      %s158 = sphi 0, %s156
      %s159 = sphi 0, %s158
      %s173 = sphi 0, %s159
      %s177 = sphi 0, %s177
      %s179 = sphi 0, %s177
      %s180 = sphi 0, %s179
      %s194 = sphi 0, %s180
      %s198 = sphi 0, %s198
      %s200 = sphi 0, %s198
      %s201 = sphi 0, %s200
      %s215 = sphi 0, %s201
      %s219 = sphi 0, %s219
      %s221 = sphi 0, %s219
      %s222 = sphi 0, %s221
      %s236 = sphi 0, %s222
      %s240 = sphi 0, %s240
      %s242 = sphi 0, %s240
      %s243 = sphi 0, %s242
      %s257 = sphi 0, %s243
      %s261 = sphi 0, %s261
      %s263 = sphi 0, %s261
      %s264 = sphi 0, %s263
      %s278 = sphi 0, %s264
      %s284 = sphi 0, %s286
      %s287 = sphi 0, %s284
      %s288 = sphi 0, %s287
      %s304 = sphi 0, %s288
      %s310 = sphi 0, %s312
      %s313 = sphi 0, %s310
      %s314 = sphi 0, %s313
      %s330 = sphi 0, %s314
    $region4: #{tpu_custom_call.1} parent=1 // loop_header_branch
      %36 = sbr.rel (%p34) target = $region8
    $region5: #{tpu_custom_call.1} parent=1 // loop_body
      %s38 = ssub.s32 %s33, 1
      %s39 = ssub.s32 %s33, 2
      %s40 = sadd.s32 %s33, 1
      %s41 = ssub.s32 %s33, %s40
      %p42 = scmp.eq.s32.totalorder %s41, 0
      %s44 = sadd.s32 %s43, 1
      %s45 = scalar_select %p42, %s43, %s44
      %p48 = pneg %p42
      %p49 = scmp.eq.s32.totalorder %s33, 1
      %p50 = por %p48, %p49
      %p51 = scmp.ne.s32.totalorder %s43, %s46
      %p52 = scmp.eq.s32.totalorder %s33, 0
      %p53 = por %p51, %p52
      %p54 = scmp.ne.s32.totalorder %s43, %s46
      %p55 = scmp.eq.s32.totalorder %s38, 1
      %p56 = por %p54, %p55
      %p57 = scmp.ne.s32.totalorder %s46, %s47
      %p58 = scmp.eq.s32.totalorder %s38, 0
      %p59 = por %p57, %p58
      %p60 = scmp.ne.s32.totalorder %s46, %s47
      %p61 = scmp.eq.s32.totalorder %s39, 1
      %p62 = por %p60, %p61
      %p64 = scmp.ne.s32.totalorder %s47, %s63
      %p65 = scmp.eq.s32.totalorder %s39, 0
      %p66 = por %p64, %p65
      %s67 = ssub.s32 %s33, %s40
      %p68 = scmp.eq.s32.totalorder %s67, 0
      %s70 = sadd.s32 %s69, 1
      %s71 = scalar_select %p68, %s69, %s70
      %p74 = pneg %p68
      %p75 = scmp.eq.s32.totalorder %s33, 1
      %p76 = por %p74, %p75
      %p77 = scmp.ne.s32.totalorder %s69, %s72
      %p78 = scmp.eq.s32.totalorder %s33, 0
      %p79 = por %p77, %p78
      %p80 = scmp.ne.s32.totalorder %s69, %s72
      %p81 = scmp.eq.s32.totalorder %s38, 1
      %p82 = por %p80, %p81
      %p83 = scmp.ne.s32.totalorder %s72, %s73
      %p84 = scmp.eq.s32.totalorder %s38, 0
      %p85 = por %p83, %p84
      %p86 = scmp.ne.s32.totalorder %s72, %s73
      %p87 = scmp.eq.s32.totalorder %s39, 1
      %p88 = por %p86, %p87
      %p90 = scmp.ne.s32.totalorder %s73, %s89
      %p91 = scmp.eq.s32.totalorder %s39, 0
      %p92 = por %p90, %p91
      %s94 = sadd.s32 %s93, 1
      %p97 = scmp.eq.s32.totalorder %s33, 1
      %p98 = scmp.ne.s32.totalorder %s93, %s95
      %p99 = scmp.eq.s32.totalorder %s33, 0
      %p100 = por %p98, %p99
      %p101 = scmp.ne.s32.totalorder %s93, %s95
      %p102 = scmp.eq.s32.totalorder %s38, 1
      %p103 = por %p101, %p102
      %p104 = scmp.ne.s32.totalorder %s95, %s96
      %p105 = scmp.eq.s32.totalorder %s38, 0
      %p106 = por %p104, %p105
      %p107 = scmp.ne.s32.totalorder %s95, %s96
      %p108 = scmp.eq.s32.totalorder %s39, 1
      %p109 = por %p107, %p108
      %p111 = scmp.ne.s32.totalorder %s96, %s110
      %p112 = scmp.eq.s32.totalorder %s39, 0
      %p113 = por %p111, %p112
      %s115 = sadd.s32 %s114, 1
      %p118 = scmp.eq.s32.totalorder %s33, 1
      %p119 = scmp.ne.s32.totalorder %s114, %s116
      %p120 = scmp.eq.s32.totalorder %s33, 0
      %p121 = por %p119, %p120
      %p122 = scmp.ne.s32.totalorder %s114, %s116
      %p123 = scmp.eq.s32.totalorder %s38, 1
      %p124 = por %p122, %p123
      %p125 = scmp.ne.s32.totalorder %s116, %s117
      %p126 = scmp.eq.s32.totalorder %s38, 0
      %p127 = por %p125, %p126
      %p128 = scmp.ne.s32.totalorder %s116, %s117
      %p129 = scmp.eq.s32.totalorder %s39, 1
      %p130 = por %p128, %p129
      %p132 = scmp.ne.s32.totalorder %s117, %s131
      %p133 = scmp.eq.s32.totalorder %s39, 0
      %p134 = por %p132, %p133
      %s136 = sadd.s32 %s135, 1
      %p139 = scmp.eq.s32.totalorder %s33, 1
      %p140 = scmp.ne.s32.totalorder %s135, %s137
      %p141 = scmp.eq.s32.totalorder %s33, 0
      %p142 = por %p140, %p141
      %p143 = scmp.ne.s32.totalorder %s135, %s137
      %p144 = scmp.eq.s32.totalorder %s38, 1
      %p145 = por %p143, %p144
      %p146 = scmp.ne.s32.totalorder %s137, %s138
      %p147 = scmp.eq.s32.totalorder %s38, 0
      %p148 = por %p146, %p147
      %p149 = scmp.ne.s32.totalorder %s137, %s138
      %p150 = scmp.eq.s32.totalorder %s39, 1
      %p151 = por %p149, %p150
      %p153 = scmp.ne.s32.totalorder %s138, %s152
      %p154 = scmp.eq.s32.totalorder %s39, 0
      %p155 = por %p153, %p154
      %s157 = sadd.s32 %s156, 1
      %p160 = scmp.eq.s32.totalorder %s33, 1
      %p161 = scmp.ne.s32.totalorder %s156, %s158
      %p162 = scmp.eq.s32.totalorder %s33, 0
      %p163 = por %p161, %p162
      %p164 = scmp.ne.s32.totalorder %s156, %s158
      %p165 = scmp.eq.s32.totalorder %s38, 1
      %p166 = por %p164, %p165
      %p167 = scmp.ne.s32.totalorder %s158, %s159
      %p168 = scmp.eq.s32.totalorder %s38, 0
      %p169 = por %p167, %p168
      %p170 = scmp.ne.s32.totalorder %s158, %s159
      %p171 = scmp.eq.s32.totalorder %s39, 1
      %p172 = por %p170, %p171
      %p174 = scmp.ne.s32.totalorder %s159, %s173
      %p175 = scmp.eq.s32.totalorder %s39, 0
      %p176 = por %p174, %p175
      %s178 = sadd.s32 %s177, 1
      %p181 = scmp.eq.s32.totalorder %s33, 1
      %p182 = scmp.ne.s32.totalorder %s177, %s179
      %p183 = scmp.eq.s32.totalorder %s33, 0
      %p184 = por %p182, %p183
      %p185 = scmp.ne.s32.totalorder %s177, %s179
      %p186 = scmp.eq.s32.totalorder %s38, 1
      %p187 = por %p185, %p186
      %p188 = scmp.ne.s32.totalorder %s179, %s180
      %p189 = scmp.eq.s32.totalorder %s38, 0
      %p190 = por %p188, %p189
      %p191 = scmp.ne.s32.totalorder %s179, %s180
      %p192 = scmp.eq.s32.totalorder %s39, 1
      %p193 = por %p191, %p192
      %p195 = scmp.ne.s32.totalorder %s180, %s194
      %p196 = scmp.eq.s32.totalorder %s39, 0
      %p197 = por %p195, %p196
      %s199 = sadd.s32 %s198, 1
      %p202 = scmp.eq.s32.totalorder %s33, 1
      %p203 = scmp.ne.s32.totalorder %s198, %s200
      %p204 = scmp.eq.s32.totalorder %s33, 0
      %p205 = por %p203, %p204
      %p206 = scmp.ne.s32.totalorder %s198, %s200
      %p207 = scmp.eq.s32.totalorder %s38, 1
      %p208 = por %p206, %p207
      %p209 = scmp.ne.s32.totalorder %s200, %s201
      %p210 = scmp.eq.s32.totalorder %s38, 0
      %p211 = por %p209, %p210
      %p212 = scmp.ne.s32.totalorder %s200, %s201
      %p213 = scmp.eq.s32.totalorder %s39, 1
      %p214 = por %p212, %p213
      %p216 = scmp.ne.s32.totalorder %s201, %s215
      %p217 = scmp.eq.s32.totalorder %s39, 0
      %p218 = por %p216, %p217
      %s220 = sadd.s32 %s219, 1
      %p223 = scmp.eq.s32.totalorder %s33, 1
      %p224 = scmp.ne.s32.totalorder %s219, %s221
      %p225 = scmp.eq.s32.totalorder %s33, 0
      %p226 = por %p224, %p225
      %p227 = scmp.ne.s32.totalorder %s219, %s221
      %p228 = scmp.eq.s32.totalorder %s38, 1
      %p229 = por %p227, %p228
      %p230 = scmp.ne.s32.totalorder %s221, %s222
      %p231 = scmp.eq.s32.totalorder %s38, 0
      %p232 = por %p230, %p231
      %p233 = scmp.ne.s32.totalorder %s221, %s222
      %p234 = scmp.eq.s32.totalorder %s39, 1
      %p235 = por %p233, %p234
      %p237 = scmp.ne.s32.totalorder %s222, %s236
      %p238 = scmp.eq.s32.totalorder %s39, 0
      %p239 = por %p237, %p238
      %s241 = sadd.s32 %s240, 1
      %p244 = scmp.eq.s32.totalorder %s33, 1
      %p245 = scmp.ne.s32.totalorder %s240, %s242
      %p246 = scmp.eq.s32.totalorder %s33, 0
      %p247 = por %p245, %p246
      %p248 = scmp.ne.s32.totalorder %s240, %s242
      %p249 = scmp.eq.s32.totalorder %s38, 1
      %p250 = por %p248, %p249
      %p251 = scmp.ne.s32.totalorder %s242, %s243
      %p252 = scmp.eq.s32.totalorder %s38, 0
      %p253 = por %p251, %p252
      %p254 = scmp.ne.s32.totalorder %s242, %s243
      %p255 = scmp.eq.s32.totalorder %s39, 1
      %p256 = por %p254, %p255
      %p258 = scmp.ne.s32.totalorder %s243, %s257
      %p259 = scmp.eq.s32.totalorder %s39, 0
      %p260 = por %p258, %p259
      %s262 = sadd.s32 %s261, 1
      %p265 = scmp.eq.s32.totalorder %s33, 1
      %p266 = scmp.ne.s32.totalorder %s261, %s263
      %p267 = scmp.eq.s32.totalorder %s33, 0
      %p268 = por %p266, %p267
      %p269 = scmp.ne.s32.totalorder %s261, %s263
      %p270 = scmp.eq.s32.totalorder %s38, 1
      %p271 = por %p269, %p270
      %p272 = scmp.ne.s32.totalorder %s263, %s264
      %p273 = scmp.eq.s32.totalorder %s38, 0
      %p274 = por %p272, %p273
      %p275 = scmp.ne.s32.totalorder %s263, %s264
      %p276 = scmp.eq.s32.totalorder %s39, 1
      %p277 = por %p275, %p276
      %p279 = scmp.ne.s32.totalorder %s264, %s278
      %p280 = scmp.eq.s32.totalorder %s39, 0
      %p281 = por %p279, %p280
      %s282 = ssub.s32 %s33, %s40
      %p283 = scmp.eq.s32.totalorder %s282, 0
      %s285 = sadd.s32 %s284, 1
      %s286 = scalar_select %p283, %s284, %s285
      %p289 = pneg %p283
      %p290 = scmp.eq.s32.totalorder %s33, 1
      %p291 = por %p289, %p290
      %p292 = scmp.ne.s32.totalorder %s284, %s287
      %p293 = scmp.eq.s32.totalorder %s33, 0
      %p294 = por %p292, %p293
      %p295 = scmp.ne.s32.totalorder %s284, %s287
      %p296 = scmp.eq.s32.totalorder %s38, 1
      %p297 = por %p295, %p296
      %p298 = scmp.ne.s32.totalorder %s287, %s288
      %p299 = scmp.eq.s32.totalorder %s38, 0
      %p300 = por %p298, %p299
      %p301 = scmp.ne.s32.totalorder %s287, %s288
      %p302 = scmp.eq.s32.totalorder %s39, 1
      %p303 = por %p301, %p302
      %p305 = scmp.ne.s32.totalorder %s288, %s304
      %p306 = scmp.eq.s32.totalorder %s39, 0
      %p307 = por %p305, %p306
      %s308 = ssub.s32 %s33, %s40
      %p309 = scmp.eq.s32.totalorder %s308, 0
      %s311 = sadd.s32 %s310, 1
      %s312 = scalar_select %p309, %s310, %s311
      %p315 = pneg %p309
      %p316 = scmp.eq.s32.totalorder %s33, 1
      %p317 = por %p315, %p316
      %p318 = scmp.ne.s32.totalorder %s310, %s313
      %p319 = scmp.eq.s32.totalorder %s33, 0
      %p320 = por %p318, %p319
      %p321 = scmp.ne.s32.totalorder %s310, %s313
      %p322 = scmp.eq.s32.totalorder %s38, 1
      %p323 = por %p321, %p322
      %p324 = scmp.ne.s32.totalorder %s313, %s314
      %p325 = scmp.eq.s32.totalorder %s38, 0
      %p326 = por %p324, %p325
      %p327 = scmp.ne.s32.totalorder %s313, %s314
      %p328 = scmp.eq.s32.totalorder %s39, 1
      %p329 = por %p327, %p328
      %p331 = scmp.ne.s32.totalorder %s314, %s330
      %p332 = scmp.eq.s32.totalorder %s39, 0
      %p333 = por %p331, %p332
      %p334 = scmp.le.s32.totalorder 1, %s33
      %p335 = scmp.lt.s32.totalorder %s33, 3
      %p336 = pnand %p334, %p335
      %p337 = pneg %p336
      // Predicated region
      $region9: #{tpu_custom_call.1} parent=5 // pred_check
        _
      $region10: #{tpu_custom_call.1} parent=5 // pred_check_branch
        %339 = sbr.rel (%p336) target = $region12
      $region11: #{tpu_custom_call.1} parent=5 // pred_region
        %s340 = ssub.s32 %s33, 1
        // Predicated region
        $region13: #{tpu_custom_call.1} parent=11 // pred_check
          %p341 = pneg %p106
        $region14: #{tpu_custom_call.1} parent=11 // pred_check_branch
          %343 = sbr.rel (%p341) target = $region16
        $region15: #{tpu_custom_call.1} parent=11 // pred_region
          %s345 = ssub.s32 128, 128
          %346 = vsyncadd [#allocation7], %s345
          %s348 = sshll.u32 [#allocation8], 4
          %s349 = int_to_ptr.vmem [resolvable:$true] %s348
          %351 = dma.hbm_to_vmem [thread:$0]  %s2, 128, %s349, [#allocation7]
        $region16: #{tpu_custom_call.1} parent=11 // pred_fallthru
          _
        // Predicated region
        $region17: #{tpu_custom_call.1} parent=11 // pred_check
          %p352 = pneg %p127
        $region18: #{tpu_custom_call.1} parent=11 // pred_check_branch
          %354 = sbr.rel (%p352) target = $region20
        $region19: #{tpu_custom_call.1} parent=11 // pred_region
          _
        $region20: #{tpu_custom_call.1} parent=11 // pred_fallthru
          _
        // Predicated region
        $region21: #{tpu_custom_call.1} parent=11 // pred_check
          %p355 = pneg %p148
        $region22: #{tpu_custom_call.1} parent=11 // pred_check_branch
          %357 = sbr.rel (%p355) target = $region24
        $region23: #{tpu_custom_call.1} parent=11 // pred_region
          %s359 = ssub.s32 128, 128
          %360 = vsyncadd [#allocation10], %s359
          %s362 = sshll.u32 [#allocation9], 4
          %s363 = int_to_ptr.vmem [resolvable:$true] %s362
          %365 = dma.hbm_to_vmem [thread:$0]  %s4, 128, %s363, [#allocation10]
        $region24: #{tpu_custom_call.1} parent=11 // pred_fallthru
          _
        // Predicated region
        $region25: #{tpu_custom_call.1} parent=11 // pred_check
          %p366 = pneg %p169
        $region26: #{tpu_custom_call.1} parent=11 // pred_check_branch
          %368 = sbr.rel (%p366) target = $region28
        $region27: #{tpu_custom_call.1} parent=11 // pred_region
          _
        $region28: #{tpu_custom_call.1} parent=11 // pred_fallthru
          _
        // Predicated region
        $region29: #{tpu_custom_call.1} parent=11 // pred_check
          %p369 = pneg %p190
        $region30: #{tpu_custom_call.1} parent=11 // pred_check_branch
          %371 = sbr.rel (%p369) target = $region32
        $region31: #{tpu_custom_call.1} parent=11 // pred_region
          _
        $region32: #{tpu_custom_call.1} parent=11 // pred_fallthru
          _
        // Predicated region
        $region33: #{tpu_custom_call.1} parent=11 // pred_check
          %p372 = pneg %p211
        $region34: #{tpu_custom_call.1} parent=11 // pred_check_branch
          %374 = sbr.rel (%p372) target = $region36
        $region35: #{tpu_custom_call.1} parent=11 // pred_region
          %s376 = ssub.s32 256, 256
          %377 = vsyncadd [#allocation10], %s376
          %s379 = sshll.u32 [#allocation11], 4
          %s380 = int_to_ptr.vmem [resolvable:$true] %s379
          %382 = dma.hbm_to_vmem [thread:$0]  %s7, 256, %s380, [#allocation10]
        $region36: #{tpu_custom_call.1} parent=11 // pred_fallthru
          _
        // Predicated region
        $region37: #{tpu_custom_call.1} parent=11 // pred_check
          %p383 = pneg %p232
        $region38: #{tpu_custom_call.1} parent=11 // pred_check_branch
          %385 = sbr.rel (%p383) target = $region40
        $region39: #{tpu_custom_call.1} parent=11 // pred_region
          _
        $region40: #{tpu_custom_call.1} parent=11 // pred_fallthru
          _
        // Predicated region
        $region41: #{tpu_custom_call.1} parent=11 // pred_check
          %p386 = pneg %p253
        $region42: #{tpu_custom_call.1} parent=11 // pred_check_branch
          %388 = sbr.rel (%p386) target = $region44
        $region43: #{tpu_custom_call.1} parent=11 // pred_region
          %s390 = ssub.s32 512, 512
          %391 = vsyncadd [#allocation13], %s390
          %s392 = sshll.u32 [#allocation12], 4
          %s393 = int_to_ptr.vmem [resolvable:$true] %s392
          %398 = dma.hbm_to_vmem [thread:$0]  %s9, 512, %s393, [#allocation13], 256, 256, 16
        $region44: #{tpu_custom_call.1} parent=11 // pred_fallthru
          _
        // Predicated region
        $region45: #{tpu_custom_call.1} parent=11 // pred_check
          %p399 = pneg %p274
        $region46: #{tpu_custom_call.1} parent=11 // pred_check_branch
          %401 = sbr.rel (%p399) target = $region48
        $region47: #{tpu_custom_call.1} parent=11 // pred_region
          %s403 = ssub.s32 512, 512
          %404 = vsyncadd [#allocation13], %s403
          %s405 = sshll.u32 [#allocation14], 4
          %s406 = int_to_ptr.vmem [resolvable:$true] %s405
          %411 = dma.hbm_to_vmem [thread:$0]  %s10, 512, %s406, [#allocation13], 256, 256, 16
        $region48: #{tpu_custom_call.1} parent=11 // pred_fallthru
          _
      $region12: #{tpu_custom_call.1} parent=5 // pred_fallthru
        _
      %p412 = scmp.lt.s32.totalorder %s33, 2
      // Predicated region
      $region49: #{tpu_custom_call.1} parent=5 // pred_check
        %p413 = pneg %p412
      $region50: #{tpu_custom_call.1} parent=5 // pred_check_branch
        %415 = sbr.rel (%p413) target = $region52
      $region51: #{tpu_custom_call.1} parent=5 // pred_region
        // Predicated region
        $region53: #{tpu_custom_call.1} parent=51 // pred_check
          %p416 = pneg %p53
        $region54: #{tpu_custom_call.1} parent=51 // pred_check_branch
          %418 = sbr.rel (%p416) target = $region56
        $region55: #{tpu_custom_call.1} parent=51 // pred_region
          %s419 = sand.u32 %s43, 1
          %s420 = scalar_lea.sflag [#allocation4], %s419
          %s421 = sand.u32 %s43, 1
          %s422 = smul.addr %s421, 16
          %s423 = scalar_lea.vmem [#allocation3], %s422
          %s425 = ssub.s32 256, 256
          %426 = vsyncadd %s420, %s425
          %s427 = smul.addr %s33, 2
          %s428 = smul.addr %s427, 128
          %s429 = scalar_lea.hbm %s0, %s428
          %s431 = sshll.u32 %s423, 4
          %s432 = int_to_ptr.vmem [resolvable:$true] %s431
          %434 = dma.hbm_to_vmem [thread:$0]  %s429, 256, %s432, %s420
        $region56: #{tpu_custom_call.1} parent=51 // pred_fallthru
          _
        // Predicated region
        $region57: #{tpu_custom_call.1} parent=51 // pred_check
          %p435 = pneg %p79
        $region58: #{tpu_custom_call.1} parent=51 // pred_check_branch
          %437 = sbr.rel (%p435) target = $region60
        $region59: #{tpu_custom_call.1} parent=51 // pred_region
          %s438 = sand.u32 %s33, 1
          %s439 = scalar_lea.sflag [#allocation7], %s438
          %s440 = sand.u32 %s69, 1
          %s441 = smul.addr %s440, 2
          %s442 = scalar_lea.vmem [#allocation6], %s441
          %s444 = ssub.s32 32, 32
          %445 = vsyncadd %s439, %s444
          %s446 = smul.addr %s33, 2
          %s447 = smul.addr %s446, 16
          %s448 = scalar_lea.hbm %s1, %s447
          %s450 = sshll.u32 %s442, 4
          %s451 = int_to_ptr.vmem [resolvable:$true] %s450
          %453 = dma.hbm_to_vmem [thread:$0]  %s448, 32, %s451, %s439
        $region60: #{tpu_custom_call.1} parent=51 // pred_fallthru
          _
      $region52: #{tpu_custom_call.1} parent=5 // pred_fallthru
        _
      %p454 = scmp.le.s32.totalorder 1, %s33
      %p455 = scmp.lt.s32.totalorder %s33, 3
      %p456 = pnand %p454, %p455
      %p457 = pneg %p456
      // Predicated region
      $region61: #{tpu_custom_call.1} parent=5 // pred_check
        _
      $region62: #{tpu_custom_call.1} parent=5 // pred_check_branch
        %459 = sbr.rel (%p456) target = $region64
      $region63: #{tpu_custom_call.1} parent=5 // pred_region
        %s460 = ssub.s32 %s33, 1
        %s461 = sand.u32 %s46, 1
        %s462 = scalar_lea.sflag [#allocation4], %s461
        %s463 = sand.u32 %s46, 1
        %s464 = smul.addr %s463, 16
        %s465 = scalar_lea.vmem [#allocation3], %s464
        // Predicated region
        $region65: #{tpu_custom_call.1} parent=63 // pred_check
          %p466 = pneg %p59
        $region66: #{tpu_custom_call.1} parent=63 // pred_check_branch
          %468 = sbr.rel (%p466) target = $region68
        $region67: #{tpu_custom_call.1} parent=63 // pred_region
          %469 = dma.done %s462, 256
        $region68: #{tpu_custom_call.1} parent=63 // pred_fallthru
          _
        %s470 = sand.u32 %s38, 1
        %s471 = scalar_lea.sflag [#allocation7], %s470
        %s472 = sand.u32 %s72, 1
        %s473 = smul.addr %s472, 2
        %s474 = scalar_lea.vmem [#allocation6], %s473
        // Predicated region
        $region69: #{tpu_custom_call.1} parent=63 // pred_check
          %p475 = pneg %p85
        $region70: #{tpu_custom_call.1} parent=63 // pred_check_branch
          %477 = sbr.rel (%p475) target = $region72
        $region71: #{tpu_custom_call.1} parent=63 // pred_region
          %478 = dma.done %s471, 32
        $region72: #{tpu_custom_call.1} parent=63 // pred_fallthru
          _
        // Predicated region
        $region73: #{tpu_custom_call.1} parent=63 // pred_check
          %p479 = pneg %p106
        $region74: #{tpu_custom_call.1} parent=63 // pred_check_branch
          %481 = sbr.rel (%p479) target = $region76
        $region75: #{tpu_custom_call.1} parent=63 // pred_region
          %482 = dma.done [#allocation7], 128
        $region76: #{tpu_custom_call.1} parent=63 // pred_fallthru
          _
        // Predicated region
        $region77: #{tpu_custom_call.1} parent=63 // pred_check
          %p483 = pneg %p148
        $region78: #{tpu_custom_call.1} parent=63 // pred_check_branch
          %485 = sbr.rel (%p483) target = $region80
        $region79: #{tpu_custom_call.1} parent=63 // pred_region
          %486 = dma.done [#allocation10], 128
        $region80: #{tpu_custom_call.1} parent=63 // pred_fallthru
          _
        // Predicated region
        $region81: #{tpu_custom_call.1} parent=63 // pred_check
          %p487 = pneg %p211
        $region82: #{tpu_custom_call.1} parent=63 // pred_check_branch
          %489 = sbr.rel (%p487) target = $region84
        $region83: #{tpu_custom_call.1} parent=63 // pred_region
          %490 = dma.done [#allocation10], 256
        $region84: #{tpu_custom_call.1} parent=63 // pred_fallthru
          _
        // Predicated region
        $region85: #{tpu_custom_call.1} parent=63 // pred_check
          %p491 = pneg %p253
        $region86: #{tpu_custom_call.1} parent=63 // pred_check_branch
          %493 = sbr.rel (%p491) target = $region88
        $region87: #{tpu_custom_call.1} parent=63 // pred_region
          %494 = dma.done [#allocation13], 512
        $region88: #{tpu_custom_call.1} parent=63 // pred_fallthru
          _
        // Predicated region
        $region89: #{tpu_custom_call.1} parent=63 // pred_check
          %p495 = pneg %p274
        $region90: #{tpu_custom_call.1} parent=63 // pred_check_branch
          %497 = sbr.rel (%p495) target = $region92
        $region91: #{tpu_custom_call.1} parent=63 // pred_region
          %498 = dma.done [#allocation13], 512
        $region92: #{tpu_custom_call.1} parent=63 // pred_fallthru
          _
        %s499 = sand.u32 %s46, 1
        %s500 = scalar_lea.sflag [#allocation4], %s499
        %s501 = sand.u32 %s46, 1
        %s502 = smul.addr %s501, 16
        %s503 = scalar_lea.vmem [#allocation3], %s502
        %p504 = pneg %p59
        %p505 = pneg %p56
        %s506 = sand.u32 %s38, 1
        %s507 = scalar_lea.sflag [#allocation7], %s506
        %s508 = sand.u32 %s72, 1
        %s509 = smul.addr %s508, 2
        %s510 = scalar_lea.vmem [#allocation6], %s509
        %p511 = pneg %p85
        %p512 = pneg %p82
        %p513 = pneg %p106
        %p514 = pneg %p103
        %p515 = pneg %p127
        %p516 = pneg %p124
        %p517 = pneg %p148
        %p518 = pneg %p145
        %p519 = pneg %p169
        %p520 = pneg %p166
        %p521 = pneg %p190
        %p522 = pneg %p187
        %p523 = pneg %p211
        %p524 = pneg %p208
        %p525 = pneg %p232
        %p526 = pneg %p229
        %p527 = pneg %p253
        %p528 = pneg %p250
        %p529 = pneg %p274
        %p530 = pneg %p271
        %p531 = pneg %p300
        %p532 = pneg %p297
        %s533 = sand.u32 %s287, 1
        %s534 = scalar_lea.sflag [#allocation5], %s533
        %s535 = sand.u32 %s287, 1
        %s536 = smul.addr %s535, 2
        %s537 = scalar_lea.vmem [#allocation15], %s536
        %p538 = pneg %p326
        %p539 = pneg %p323
        %s540 = sand.u32 %s313, 1
        %s541 = scalar_lea.sflag [#allocation17], %s540
        %s542 = sand.u32 %s313, 1
        %s543 = smul.addr %s542, 2
        %s544 = scalar_lea.vmem [#allocation16], %s543
        %v545 = vld [vmem:[%s465] sm:$0xff]
        %v546 = vld [vmem:[%s465 + $0x8] sm:$0xff]
        %547 = vrot.lane.b32.xlu0 %v545, 17
        %v548 = vpop.permute.xlu0 %547
        %549 = vrot.lane.b32.xlu0 %v546, 17
        %v550 = vpop.permute.xlu0 %549
        %v551 = vlaneseq
        %v552 = vand.u32 %v551, 127
        %vm553 = vcmp.lt.s32.totalorder %v552, 17
        %v554 = vsel %vm553, %v548, %v550
        %v555 = vsel %vm553, %v550, %v548
        %v556 = vld [vmem:[%s6] ss:$8 sm:$0x3]
        %v558 = vlaneseq
        %v559 = vshrl.u32 %v558, 7
        %v560 = vsub.s32 0, %v559
        %v561 = vrot.slane %v556, %v560
        %v562 = vlaneseq
        %v563 = vshrl.u32 %v562, 7
        %v564 = vsub.s32 1, %v563
        %v565 = vrot.slane %v556, %v564
        %v568 = vmul.f32 %v555, %v561
        %v569 = vmul.f32 %v554, %v565
        %570 = vst [vmem:[#allocation2] sm:$0xff] %v568
        %571 = vst [vmem:[#allocation2 + $0x8] sm:$0xff] %v569
        %572 = vrot.lane.b32.xlu0 %v545, 16
        %v573 = vpop.permute.xlu0 %572
        %574 = vrot.lane.b32.xlu0 %v546, 16
        %v575 = vpop.permute.xlu0 %574
        %vm576 = vcmp.lt.s32.totalorder %v552, 16
        %v577 = vsel %vm576, %v573, %v575
        %v578 = vsel %vm576, %v575, %v573
        %s579 = scalar_lea.vmem %s6, 1
        %v580 = vld [vmem:[%s579] ss:$8 sm:$0x3]
        %v582 = vlaneseq
        %v583 = vshrl.u32 %v582, 7
        %v584 = vsub.s32 0, %v583
        %v585 = vrot.slane %v580, %v584
        %v586 = vlaneseq
        %v587 = vshrl.u32 %v586, 7
        %v588 = vsub.s32 1, %v587
        %v589 = vrot.slane %v580, %v588
        %v592 = vmul.f32 %v578, %v585
        %v593 = vmul.f32 %v577, %v589
        %594 = vst [vmem:[#allocation2 + $0x10] sm:$0xff] %v592
        %595 = vst [vmem:[#allocation2 + $0x18] sm:$0xff] %v593
        %596 = vrot.lane.b32.xlu0 %v545, 15
        %v597 = vpop.permute.xlu0 %596
        %598 = vrot.lane.b32.xlu0 %v546, 15
        %v599 = vpop.permute.xlu0 %598
        %vm600 = vcmp.lt.s32.totalorder %v552, 15
        %v601 = vsel %vm600, %v597, %v599
        %v602 = vsel %vm600, %v599, %v597
        %s603 = scalar_lea.vmem %s6, 2
        %v604 = vld [vmem:[%s603] ss:$8 sm:$0x3]
        %v606 = vlaneseq
        %v607 = vshrl.u32 %v606, 7
        %v608 = vsub.s32 0, %v607
        %v609 = vrot.slane %v604, %v608
        %v610 = vlaneseq
        %v611 = vshrl.u32 %v610, 7
        %v612 = vsub.s32 1, %v611
        %v613 = vrot.slane %v604, %v612
        %v616 = vmul.f32 %v602, %v609
        %v617 = vmul.f32 %v601, %v613
        %618 = vst [vmem:[#allocation2 + $0x20] sm:$0xff] %v616
        %619 = vst [vmem:[#allocation2 + $0x28] sm:$0xff] %v617
        %620 = vrot.lane.b32.xlu0 %v545, 1
        %v621 = vpop.permute.xlu0 %620
        %622 = vrot.lane.b32.xlu0 %v546, 1
        %v623 = vpop.permute.xlu0 %622
        %vm624 = vcmp.lt.s32.totalorder %v552, 1
        %v625 = vsel %vm624, %v621, %v623
        %v626 = vsel %vm624, %v623, %v621
        %s627 = scalar_lea.vmem %s6, 3
        %v628 = vld [vmem:[%s627] ss:$8 sm:$0x3]
        %v630 = vlaneseq
        %v631 = vshrl.u32 %v630, 7
        %v632 = vsub.s32 0, %v631
        %v633 = vrot.slane %v628, %v632
        %v634 = vlaneseq
        %v635 = vshrl.u32 %v634, 7
        %v636 = vsub.s32 1, %v635
        %v637 = vrot.slane %v628, %v636
        %v640 = vmul.f32 %v626, %v633
        %v641 = vmul.f32 %v625, %v637
        %642 = vst [vmem:[#allocation2 + $0x30] sm:$0xff] %v640
        %643 = vst [vmem:[#allocation2 + $0x38] sm:$0xff] %v641
        %s644 = scalar_lea.vmem %s6, 4
        %v645 = vld [vmem:[%s644] ss:$8 sm:$0x3]
        %v647 = vlaneseq
        %v648 = vshrl.u32 %v647, 7
        %v649 = vsub.s32 0, %v648
        %v650 = vrot.slane %v645, %v649
        %v651 = vlaneseq
        %v652 = vshrl.u32 %v651, 7
        %v653 = vsub.s32 1, %v652
        %v654 = vrot.slane %v645, %v653
        %v657 = vmul.f32 %v545, %v650
        %v658 = vmul.f32 %v546, %v654
        %659 = vst [vmem:[#allocation2 + $0x40] sm:$0xff] %v657
        %660 = vst [vmem:[#allocation2 + $0x48] sm:$0xff] %v658
        %661 = vrot.lane.b32.xlu0 %v545, 127
        %v662 = vpop.permute.xlu0 %661
        %663 = vrot.lane.b32.xlu0 %v546, 127
        %v664 = vpop.permute.xlu0 %663
        %vm665 = vcmp.lt.s32.totalorder %v552, 127
        %v666 = vsel %vm665, %v662, %v664
        %v667 = vsel %vm665, %v664, %v662
        %s668 = scalar_lea.vmem %s6, 5
        %v669 = vld [vmem:[%s668] ss:$8 sm:$0x3]
        %v671 = vlaneseq
        %v672 = vshrl.u32 %v671, 7
        %v673 = vsub.s32 0, %v672
        %v674 = vrot.slane %v669, %v673
        %v675 = vlaneseq
        %v676 = vshrl.u32 %v675, 7
        %v677 = vsub.s32 1, %v676
        %v678 = vrot.slane %v669, %v677
        %v681 = vmul.f32 %v666, %v674
        %v682 = vmul.f32 %v667, %v678
        %683 = vst [vmem:[#allocation2 + $0x50] sm:$0xff] %v681
        %684 = vst [vmem:[#allocation2 + $0x58] sm:$0xff] %v682
        %685 = vrot.lane.b32.xlu0 %v545, 113
        %v686 = vpop.permute.xlu0 %685
        %687 = vrot.lane.b32.xlu0 %v546, 113
        %v688 = vpop.permute.xlu0 %687
        %vm689 = vcmp.lt.s32.totalorder %v552, 113
        %v690 = vsel %vm689, %v686, %v688
        %v691 = vsel %vm689, %v688, %v686
        %s692 = scalar_lea.vmem %s6, 6
        %v693 = vld [vmem:[%s692] ss:$8 sm:$0x3]
        %v695 = vlaneseq
        %v696 = vshrl.u32 %v695, 7
        %v697 = vsub.s32 0, %v696
        %v698 = vrot.slane %v693, %v697
        %v699 = vlaneseq
        %v700 = vshrl.u32 %v699, 7
        %v701 = vsub.s32 1, %v700
        %v702 = vrot.slane %v693, %v701
        %v705 = vmul.f32 %v690, %v698
        %v706 = vmul.f32 %v691, %v702
        %707 = vst [vmem:[#allocation2 + $0x60] sm:$0xff] %v705
        %708 = vst [vmem:[#allocation2 + $0x68] sm:$0xff] %v706
        %709 = vrot.lane.b32.xlu0 %v545, 112
        %v710 = vpop.permute.xlu0 %709
        %711 = vrot.lane.b32.xlu0 %v546, 112
        %v712 = vpop.permute.xlu0 %711
        %vm713 = vcmp.lt.s32.totalorder %v552, 112
        %v714 = vsel %vm713, %v710, %v712
        %v715 = vsel %vm713, %v712, %v710
        %s716 = scalar_lea.vmem %s6, 7
        %v717 = vld [vmem:[%s716] ss:$8 sm:$0x3]
        %v719 = vlaneseq
        %v720 = vshrl.u32 %v719, 7
        %v721 = vsub.s32 0, %v720
        %v722 = vrot.slane %v717, %v721
        %v723 = vlaneseq
        %v724 = vshrl.u32 %v723, 7
        %v725 = vsub.s32 1, %v724
        %v726 = vrot.slane %v717, %v725
        %v729 = vmul.f32 %v714, %v722
        %v730 = vmul.f32 %v715, %v726
        %731 = vst [vmem:[#allocation2 + $0x70] sm:$0xff] %v729
        %732 = vst [vmem:[#allocation2 + $0x78] sm:$0xff] %v730
        %733 = vrot.lane.b32.xlu0 %v545, 111
        %v734 = vpop.permute.xlu0 %733
        %735 = vrot.lane.b32.xlu0 %v546, 111
        %v736 = vpop.permute.xlu0 %735
        %vm737 = vcmp.lt.s32.totalorder %v552, 111
        %v738 = vsel %vm737, %v734, %v736
        %v739 = vsel %vm737, %v736, %v734
        %s740 = scalar_lea.vmem %s6, 16
        %v741 = vld [vmem:[%s740] ss:$8 sm:$0x3]
        %v743 = vlaneseq
        %v744 = vshrl.u32 %v743, 7
        %v745 = vsub.s32 0, %v744
        %v746 = vrot.slane %v741, %v745
        %v747 = vlaneseq
        %v748 = vshrl.u32 %v747, 7
        %v749 = vsub.s32 1, %v748
        %v750 = vrot.slane %v741, %v749
        %v753 = vmul.f32 %v738, %v746
        %v754 = vmul.f32 %v739, %v750
        %755 = vst [vmem:[#allocation2 + $0x80] sm:$0xff] %v753
        %756 = vst [vmem:[#allocation2 + $0x88] sm:$0xff] %v754
        %v757 = vld [vmem:[#allocation8] sm:$0xff]
        %v758 = vld [vmem:[#allocation2] sm:$0xff]
        %v759 = vld [vmem:[#allocation2 + $0x8] sm:$0xff]
        %v760 = vld [vmem:[#allocation2 + $0x10] sm:$0xff]
        %v761 = vld [vmem:[#allocation2 + $0x18] sm:$0xff]
        %v762 = vld [vmem:[#allocation2 + $0x20] sm:$0xff]
        %v763 = vld [vmem:[#allocation2 + $0x28] sm:$0xff]
        %v764 = vld [vmem:[#allocation2 + $0x30] sm:$0xff]
        %v765 = vld [vmem:[#allocation2 + $0x38] sm:$0xff]
        %v766 = vld [vmem:[#allocation2 + $0x40] sm:$0xff]
        %v767 = vld [vmem:[#allocation2 + $0x48] sm:$0xff]
        %v768 = vld [vmem:[#allocation2 + $0x50] sm:$0xff]
        %v769 = vld [vmem:[#allocation2 + $0x58] sm:$0xff]
        %v770 = vld [vmem:[#allocation2 + $0x60] sm:$0xff]
        %v771 = vld [vmem:[#allocation2 + $0x68] sm:$0xff]
        %v772 = vld [vmem:[#allocation2 + $0x70] sm:$0xff]
        %v773 = vld [vmem:[#allocation2 + $0x78] sm:$0xff]
        %v774 = vld [vmem:[#allocation2 + $0x80] sm:$0xff]
        %v775 = vld [vmem:[#allocation2 + $0x88] sm:$0xff]
        %v776 = vld [vmem:[%s3] sm:$0xff]
        %778 = vset.pattern.permute.xlu0 0
        %779 = vperm.xlu0 %778, %v776
        %v780 = vpop.permute.xlu0 %779
        %vm782 = vcmask 588800
        %v784 = vsel %vm782, %v757, 0
        %786 = vmatprep.subr.mxu0 %v759
        %787 = vmatpush1.msra.mxu0 %v758
        %788 = vmatprep.subr.mxu0 %v761
        %789 = vmatpush1.msra.mxu0 %v760
        %790 = vmatprep.subr.mxu0 %v763
        %791 = vmatpush1.msra.mxu0 %v762
        %792 = vmatprep.subr.mxu0 %v765
        %793 = vmatpush1.msra.mxu0 %v764
        %794 = vmatprep.subr.mxu0 %v767
        %795 = vmatpush1.msra.mxu0 %v766
        %796 = vmatprep.subr.mxu0 %v769
        %797 = vmatpush1.msra.mxu0 %v768
        %798 = vmatprep.subr.mxu0 %v771
        %799 = vmatpush1.msra.mxu0 %v770
        %800 = vmatprep.subr.mxu0 %v773
        %801 = vmatpush1.msra.mxu0 %v772
        %802 = vmatprep.subr.mxu0 %v775
        %803 = vmatpush1.msra.mxu0 %v774
        %804 = vmatprep.subr.mxu0 0.0
        %805 = vmatpush1.msra.mxu0 0.0
        %806 = vmatprep.subr.mxu0 0.0
        %807 = vmatpush1.msra.mxu0 0.0
        %808 = vmatprep.subr.mxu0 0.0
        %809 = vmatpush1.msra.mxu0 0.0
        %810 = vmatprep.subr.mxu0 0.0
        %811 = vmatpush1.msra.mxu0 0.0
        %812 = vmatprep.subr.mxu0 0.0
        %813 = vmatpush1.msra.mxu0 0.0
        %814 = vmatprep.subr.mxu0 0.0
        %815 = vmatpush1.msra.mxu0 0.0
        %816 = vmatprep.subr.mxu0 0.0
        %817 = vmatpush1.msra.mxu0 0.0
        %818 = vmatprep.subr.mxu0 0.0
        %819 = vmatpush1.msra.mxu0 0.0
        %820 = vmatprep.subr.mxu0 0.0
        %821 = vmatpush1.msra.mxu0 0.0
        %822 = vmatprep.subr.mxu0 0.0
        %823 = vmatpush1.msra.mxu0 0.0
        %824 = vmatprep.subr.mxu0 0.0
        %825 = vmatpush1.msra.mxu0 0.0
        %826 = vmatprep.subr.mxu0 0.0
        %827 = vmatpush1.msra.mxu0 0.0
        %828 = vmatprep.subr.mxu0 0.0
        %829 = vmatpush1.msra.mxu0 0.0
        %830 = vmatprep.subr.mxu0 0.0
        %831 = vmatpush1.msra.mxu0 0.0
        %832 = vmatprep.subr.mxu0 0.0
        %833 = vmatpush1.msra.mxu0 0.0
        %834 = vmatprep.subr.mxu0 0.0
        %835 = vmatpush1.msra.mxu0 0.0
        %836 = vmatprep.subr.mxu0 0.0
        %837 = vmatpush1.msra.mxu0 0.0
        %838 = vmatprep.subr.mxu0 0.0
        %839 = vmatpush1.msra.mxu0 0.0
        %840 = vmatprep.subr.mxu0 0.0
        %841 = vmatpush1.msra.mxu0 0.0
        %842 = vmatprep.subr.mxu0 0.0
        %843 = vmatpush1.msra.mxu0 0.0
        %844 = vmatprep.subr.mxu0 0.0
        %845 = vmatpush1.msra.mxu0 0.0
        %846 = vmatprep.subr.mxu0 0.0
        %847 = vmatpush1.msra.mxu0 0.0
        %848 = vmatprep.subr.mxu0 0.0
        %849 = vmatpush1.msra.mxu0 0.0
        %850 = vmatprep.mubr.f32.mxu0 0.0
        %851 = vmatmul.mubr.f32.gmra.mrb[0].mxu0 %v784
        %v852 = vpop.f32.mrb[0].mxu0
        %v853 = vadd.f32 %v780, %v852
        %v854 = vpop.f32.mrb[0].mxu0
        %v855 = vadd.f32 %v780, %v854
        %856 = vdwg.mxu0
        %v857 = vmax.f32 %v853, 0.0
        %v858 = vmax.f32 %v855, 0.0
        %859 = vrot.lane.b32.xlu0 %v857, 17
        %v860 = vpop.permute.xlu0 %859
        %861 = vrot.lane.b32.xlu0 %v858, 17
        %v862 = vpop.permute.xlu0 %861
        %v863 = vsel %vm553, %v860, %v862
        %v864 = vsel %vm553, %v862, %v860
        %v865 = vld [vmem:[%s6] ss:$8 sm:$0x3]
        %v867 = vlaneseq
        %v868 = vshrl.u32 %v867, 7
        %v869 = vsub.s32 0, %v868
        %v870 = vrot.slane %v865, %v869
        %v871 = vlaneseq
        %v872 = vshrl.u32 %v871, 7
        %v873 = vsub.s32 1, %v872
        %v874 = vrot.slane %v865, %v873
        %v877 = vmul.f32 %v864, %v870
        %v878 = vmul.f32 %v863, %v874
        %879 = vst [vmem:[#allocation2] sm:$0xff] %v877
        %880 = vst [vmem:[#allocation2 + $0x8] sm:$0xff] %v878
        %881 = vrot.lane.b32.xlu0 %v857, 16
        %v882 = vpop.permute.xlu0 %881
        %883 = vrot.lane.b32.xlu0 %v858, 16
        %v884 = vpop.permute.xlu0 %883
        %v885 = vsel %vm576, %v882, %v884
        %v886 = vsel %vm576, %v884, %v882
        %v887 = vld [vmem:[%s579] ss:$8 sm:$0x3]
        %v889 = vlaneseq
        %v890 = vshrl.u32 %v889, 7
        %v891 = vsub.s32 0, %v890
        %v892 = vrot.slane %v887, %v891
        %v893 = vlaneseq
        %v894 = vshrl.u32 %v893, 7
        %v895 = vsub.s32 1, %v894
        %v896 = vrot.slane %v887, %v895
        %v899 = vmul.f32 %v886, %v892
        %v900 = vmul.f32 %v885, %v896
        %901 = vst [vmem:[#allocation2 + $0x10] sm:$0xff] %v899
        %902 = vst [vmem:[#allocation2 + $0x18] sm:$0xff] %v900
        %903 = vrot.lane.b32.xlu0 %v857, 15
        %v904 = vpop.permute.xlu0 %903
        %905 = vrot.lane.b32.xlu0 %v858, 15
        %v906 = vpop.permute.xlu0 %905
        %v907 = vsel %vm600, %v904, %v906
        %v908 = vsel %vm600, %v906, %v904
        %v909 = vld [vmem:[%s603] ss:$8 sm:$0x3]
        %v911 = vlaneseq
        %v912 = vshrl.u32 %v911, 7
        %v913 = vsub.s32 0, %v912
        %v914 = vrot.slane %v909, %v913
        %v915 = vlaneseq
        %v916 = vshrl.u32 %v915, 7
        %v917 = vsub.s32 1, %v916
        %v918 = vrot.slane %v909, %v917
        %v921 = vmul.f32 %v908, %v914
        %v922 = vmul.f32 %v907, %v918
        %923 = vst [vmem:[#allocation2 + $0x20] sm:$0xff] %v921
        %924 = vst [vmem:[#allocation2 + $0x28] sm:$0xff] %v922
        %925 = vrot.lane.b32.xlu0 %v857, 1
        %v926 = vpop.permute.xlu0 %925
        %927 = vrot.lane.b32.xlu0 %v858, 1
        %v928 = vpop.permute.xlu0 %927
        %v929 = vsel %vm624, %v926, %v928
        %v930 = vsel %vm624, %v928, %v926
        %v931 = vld [vmem:[%s627] ss:$8 sm:$0x3]
        %v933 = vlaneseq
        %v934 = vshrl.u32 %v933, 7
        %v935 = vsub.s32 0, %v934
        %v936 = vrot.slane %v931, %v935
        %v937 = vlaneseq
        %v938 = vshrl.u32 %v937, 7
        %v939 = vsub.s32 1, %v938
        %v940 = vrot.slane %v931, %v939
        %v943 = vmul.f32 %v930, %v936
        %v944 = vmul.f32 %v929, %v940
        %945 = vst [vmem:[#allocation2 + $0x30] sm:$0xff] %v943
        %946 = vst [vmem:[#allocation2 + $0x38] sm:$0xff] %v944
        %v947 = vld [vmem:[%s644] ss:$8 sm:$0x3]
        %v949 = vlaneseq
        %v950 = vshrl.u32 %v949, 7
        %v951 = vsub.s32 0, %v950
        %v952 = vrot.slane %v947, %v951
        %v953 = vlaneseq
        %v954 = vshrl.u32 %v953, 7
        %v955 = vsub.s32 1, %v954
        %v956 = vrot.slane %v947, %v955
        %v959 = vmul.f32 %v857, %v952
        %v960 = vmul.f32 %v858, %v956
        %961 = vst [vmem:[#allocation2 + $0x40] sm:$0xff] %v959
        %962 = vst [vmem:[#allocation2 + $0x48] sm:$0xff] %v960
        %963 = vrot.lane.b32.xlu0 %v857, 127
        %v964 = vpop.permute.xlu0 %963
        %965 = vrot.lane.b32.xlu0 %v858, 127
        %v966 = vpop.permute.xlu0 %965
        %v967 = vsel %vm665, %v964, %v966
        %v968 = vsel %vm665, %v966, %v964
        %v969 = vld [vmem:[%s668] ss:$8 sm:$0x3]
        %v971 = vlaneseq
        %v972 = vshrl.u32 %v971, 7
        %v973 = vsub.s32 0, %v972
        %v974 = vrot.slane %v969, %v973
        %v975 = vlaneseq
        %v976 = vshrl.u32 %v975, 7
        %v977 = vsub.s32 1, %v976
        %v978 = vrot.slane %v969, %v977
        %v981 = vmul.f32 %v967, %v974
        %v982 = vmul.f32 %v968, %v978
        %983 = vst [vmem:[#allocation2 + $0x50] sm:$0xff] %v981
        %984 = vst [vmem:[#allocation2 + $0x58] sm:$0xff] %v982
        %985 = vrot.lane.b32.xlu0 %v857, 113
        %v986 = vpop.permute.xlu0 %985
        %987 = vrot.lane.b32.xlu0 %v858, 113
        %v988 = vpop.permute.xlu0 %987
        %v989 = vsel %vm689, %v986, %v988
        %v990 = vsel %vm689, %v988, %v986
        %v991 = vld [vmem:[%s692] ss:$8 sm:$0x3]
        %v993 = vlaneseq
        %v994 = vshrl.u32 %v993, 7
        %v995 = vsub.s32 0, %v994
        %v996 = vrot.slane %v991, %v995
        %v997 = vlaneseq
        %v998 = vshrl.u32 %v997, 7
        %v999 = vsub.s32 1, %v998
        %v1000 = vrot.slane %v991, %v999
        %v1003 = vmul.f32 %v989, %v996
        %v1004 = vmul.f32 %v990, %v1000
        %1005 = vst [vmem:[#allocation2 + $0x60] sm:$0xff] %v1003
        %1006 = vst [vmem:[#allocation2 + $0x68] sm:$0xff] %v1004
        %1007 = vrot.lane.b32.xlu0 %v857, 112
        %v1008 = vpop.permute.xlu0 %1007
        %1009 = vrot.lane.b32.xlu0 %v858, 112
        %v1010 = vpop.permute.xlu0 %1009
        %v1011 = vsel %vm713, %v1008, %v1010
        %v1012 = vsel %vm713, %v1010, %v1008
        %v1013 = vld [vmem:[%s716] ss:$8 sm:$0x3]
        %v1015 = vlaneseq
        %v1016 = vshrl.u32 %v1015, 7
        %v1017 = vsub.s32 0, %v1016
        %v1018 = vrot.slane %v1013, %v1017
        %v1019 = vlaneseq
        %v1020 = vshrl.u32 %v1019, 7
        %v1021 = vsub.s32 1, %v1020
        %v1022 = vrot.slane %v1013, %v1021
        %v1025 = vmul.f32 %v1011, %v1018
        %v1026 = vmul.f32 %v1012, %v1022
        %1027 = vst [vmem:[#allocation2 + $0x70] sm:$0xff] %v1025
        %1028 = vst [vmem:[#allocation2 + $0x78] sm:$0xff] %v1026
        %1029 = vrot.lane.b32.xlu0 %v857, 111
        %v1030 = vpop.permute.xlu0 %1029
        %1031 = vrot.lane.b32.xlu0 %v858, 111
        %v1032 = vpop.permute.xlu0 %1031
        %v1033 = vsel %vm737, %v1030, %v1032
        %v1034 = vsel %vm737, %v1032, %v1030
        %v1035 = vld [vmem:[%s740] ss:$8 sm:$0x3]
        %v1037 = vlaneseq
        %v1038 = vshrl.u32 %v1037, 7
        %v1039 = vsub.s32 0, %v1038
        %v1040 = vrot.slane %v1035, %v1039
        %v1041 = vlaneseq
        %v1042 = vshrl.u32 %v1041, 7
        %v1043 = vsub.s32 1, %v1042
        %v1044 = vrot.slane %v1035, %v1043
        %v1047 = vmul.f32 %v1033, %v1040
        %v1048 = vmul.f32 %v1034, %v1044
        %1049 = vst [vmem:[#allocation2 + $0x80] sm:$0xff] %v1047
        %1050 = vst [vmem:[#allocation2 + $0x88] sm:$0xff] %v1048
        %v1051 = vld [vmem:[#allocation9] sm:$0xff]
        %v1052 = vld [vmem:[#allocation2] sm:$0xff]
        %v1053 = vld [vmem:[#allocation2 + $0x8] sm:$0xff]
        %v1054 = vld [vmem:[#allocation2 + $0x10] sm:$0xff]
        %v1055 = vld [vmem:[#allocation2 + $0x18] sm:$0xff]
        %v1056 = vld [vmem:[#allocation2 + $0x20] sm:$0xff]
        %v1057 = vld [vmem:[#allocation2 + $0x28] sm:$0xff]
        %v1058 = vld [vmem:[#allocation2 + $0x30] sm:$0xff]
        %v1059 = vld [vmem:[#allocation2 + $0x38] sm:$0xff]
        %v1060 = vld [vmem:[#allocation2 + $0x40] sm:$0xff]
        %v1061 = vld [vmem:[#allocation2 + $0x48] sm:$0xff]
        %v1062 = vld [vmem:[#allocation2 + $0x50] sm:$0xff]
        %v1063 = vld [vmem:[#allocation2 + $0x58] sm:$0xff]
        %v1064 = vld [vmem:[#allocation2 + $0x60] sm:$0xff]
        %v1065 = vld [vmem:[#allocation2 + $0x68] sm:$0xff]
        %v1066 = vld [vmem:[#allocation2 + $0x70] sm:$0xff]
        %v1067 = vld [vmem:[#allocation2 + $0x78] sm:$0xff]
        %v1068 = vld [vmem:[#allocation2 + $0x80] sm:$0xff]
        %v1069 = vld [vmem:[#allocation2 + $0x88] sm:$0xff]
        %v1070 = vld [vmem:[%s5] sm:$0xff]
        %1072 = vset.pattern.permute.xlu0 0
        %1073 = vperm.xlu0 %1072, %v1070
        %v1074 = vpop.permute.xlu0 %1073
        %v1077 = vsel %vm782, %v1051, 0
        %1079 = vmatprep.subr.mxu0 %v1053
        %1080 = vmatpush1.msra.mxu0 %v1052
        %1081 = vmatprep.subr.mxu0 %v1055
        %1082 = vmatpush1.msra.mxu0 %v1054
        %1083 = vmatprep.subr.mxu0 %v1057
        %1084 = vmatpush1.msra.mxu0 %v1056
        %1085 = vmatprep.subr.mxu0 %v1059
        %1086 = vmatpush1.msra.mxu0 %v1058
        %1087 = vmatprep.subr.mxu0 %v1061
        %1088 = vmatpush1.msra.mxu0 %v1060
        %1089 = vmatprep.subr.mxu0 %v1063
        %1090 = vmatpush1.msra.mxu0 %v1062
        %1091 = vmatprep.subr.mxu0 %v1065
        %1092 = vmatpush1.msra.mxu0 %v1064
        %1093 = vmatprep.subr.mxu0 %v1067
        %1094 = vmatpush1.msra.mxu0 %v1066
        %1095 = vmatprep.subr.mxu0 %v1069
        %1096 = vmatpush1.msra.mxu0 %v1068
        %1097 = vmatprep.subr.mxu0 0.0
        %1098 = vmatpush1.msra.mxu0 0.0
        %1099 = vmatprep.subr.mxu0 0.0
        %1100 = vmatpush1.msra.mxu0 0.0
        %1101 = vmatprep.subr.mxu0 0.0
        %1102 = vmatpush1.msra.mxu0 0.0
        %1103 = vmatprep.subr.mxu0 0.0
        %1104 = vmatpush1.msra.mxu0 0.0
        %1105 = vmatprep.subr.mxu0 0.0
        %1106 = vmatpush1.msra.mxu0 0.0
        %1107 = vmatprep.subr.mxu0 0.0
        %1108 = vmatpush1.msra.mxu0 0.0
        %1109 = vmatprep.subr.mxu0 0.0
        %1110 = vmatpush1.msra.mxu0 0.0
        %1111 = vmatprep.subr.mxu0 0.0
        %1112 = vmatpush1.msra.mxu0 0.0
        %1113 = vmatprep.subr.mxu0 0.0
        %1114 = vmatpush1.msra.mxu0 0.0
        %1115 = vmatprep.subr.mxu0 0.0
        %1116 = vmatpush1.msra.mxu0 0.0
        %1117 = vmatprep.subr.mxu0 0.0
        %1118 = vmatpush1.msra.mxu0 0.0
        %1119 = vmatprep.subr.mxu0 0.0
        %1120 = vmatpush1.msra.mxu0 0.0
        %1121 = vmatprep.subr.mxu0 0.0
        %1122 = vmatpush1.msra.mxu0 0.0
        %1123 = vmatprep.subr.mxu0 0.0
        %1124 = vmatpush1.msra.mxu0 0.0
        %1125 = vmatprep.subr.mxu0 0.0
        %1126 = vmatpush1.msra.mxu0 0.0
        %1127 = vmatprep.subr.mxu0 0.0
        %1128 = vmatpush1.msra.mxu0 0.0
        %1129 = vmatprep.subr.mxu0 0.0
        %1130 = vmatpush1.msra.mxu0 0.0
        %1131 = vmatprep.subr.mxu0 0.0
        %1132 = vmatpush1.msra.mxu0 0.0
        %1133 = vmatprep.subr.mxu0 0.0
        %1134 = vmatpush1.msra.mxu0 0.0
        %1135 = vmatprep.subr.mxu0 0.0
        %1136 = vmatpush1.msra.mxu0 0.0
        %1137 = vmatprep.subr.mxu0 0.0
        %1138 = vmatpush1.msra.mxu0 0.0
        %1139 = vmatprep.subr.mxu0 0.0
        %1140 = vmatpush1.msra.mxu0 0.0
        %1141 = vmatprep.subr.mxu0 0.0
        %1142 = vmatpush1.msra.mxu0 0.0
        %1143 = vmatprep.mubr.f32.mxu0 0.0
        %1144 = vmatmul.mubr.f32.gmra.mrb[0].mxu0 %v1077
        %v1145 = vpop.f32.mrb[0].mxu0
        %v1146 = vadd.f32 %v1074, %v1145
        %v1147 = vpop.f32.mrb[0].mxu0
        %v1148 = vadd.f32 %v1074, %v1147
        %1149 = vdwg.mxu0
        %v1152 = vcombine.low %v1146, %v1148
        %v1154 = vunpack.c.l.s4 1966171168
        %v1155 = vunpack.c.0.s8 %v1154
        %v1156 = vlaneseq
        %v1157 = vshrl.u32 %v1156, 7
        %v1158 = vsub.s32 %v1155, %v1157
        %v1159 = vrot.slane %v1152, %v1158
        %v1161 = vunpack.c.l.s4 1966171168
        %v1162 = vunpack.c.0.s8 %v1161
        %v1163 = vlaneseq
        %v1164 = vshrl.u32 %v1163, 7
        %v1165 = vsub.s32 %v1162, %v1164
        %v1166 = vrot.slane %v1159, %v1165
        %v1168 = vlaneseq
        %vm1169 = vcmp.ge.s32.totalorder %v1168, 0
        %vm1170 = vcmp.lt.s32.totalorder %v1168, 256
        %vm1171 = vmand %vm1169, %vm1170
        %1172 = vst.msk [vmem:[%s537] sm:$0x3] %vm1171, %v1166
        %v1173 = vld [vmem:[%s474] sm:$0x3]
        %v1175 = vlaneseq
        %v1176 = vshrl.u32 %v1175, 7
        %v1177 = vsub.s32 0, %v1176
        %v1178 = vrot.slane %v1173, %v1177
        %v1179 = vlaneseq
        %v1180 = vshrl.u32 %v1179, 7
        %v1181 = vsub.s32 1, %v1180
        %v1182 = vrot.slane %v1173, %v1181
        %1185 = vrot.lane.b32.xlu0 %v1178, 48
        %v1186 = vpop.permute.xlu0 %1185
        %1187 = vrot.lane.b32.xlu0 %v1182, 48
        %v1188 = vpop.permute.xlu0 %1187
        %vm1189 = vcmp.lt.s32.totalorder %v552, 48
        %v1190 = vsel %vm1189, %v1186, %v1188
        %v1191 = vsel %vm1189, %v1188, %v1186
        %v1192 = vld [vmem:[#allocation11] ss:$8 sm:$0x3]
        %v1194 = vlaneseq
        %v1195 = vshrl.u32 %v1194, 7
        %v1196 = vsub.s32 0, %v1195
        %v1197 = vrot.slane %v1192, %v1196
        %v1198 = vlaneseq
        %v1199 = vshrl.u32 %v1198, 7
        %v1200 = vsub.s32 1, %v1199
        %v1201 = vrot.slane %v1192, %v1200
        %v1204 = vmul.f32 %v1191, %v1197
        %v1205 = vmul.f32 %v1190, %v1201
        %1206 = vrot.lane.b32.xlu0 %v1178, 32
        %v1207 = vpop.permute.xlu0 %1206
        %1208 = vrot.lane.b32.xlu0 %v1182, 32
        %v1209 = vpop.permute.xlu0 %1208
        %vm1210 = vcmp.lt.s32.totalorder %v552, 32
        %v1211 = vsel %vm1210, %v1207, %v1209
        %v1212 = vsel %vm1210, %v1209, %v1207
        %s1213 = scalar_lea.vmem [#allocation11], 1
        %v1214 = vld [vmem:[%s1213] ss:$8 sm:$0x3]
        %v1216 = vlaneseq
        %v1217 = vshrl.u32 %v1216, 7
        %v1218 = vsub.s32 0, %v1217
        %v1219 = vrot.slane %v1214, %v1218
        %v1220 = vlaneseq
        %v1221 = vshrl.u32 %v1220, 7
        %v1222 = vsub.s32 1, %v1221
        %v1223 = vrot.slane %v1214, %v1222
        %v1226 = vmul.f32 %v1212, %v1219
        %v1227 = vmul.f32 %v1211, %v1223
        %v1228 = vadd.f32 %v1204, %v1226
        %v1229 = vadd.f32 %v1205, %v1227
        %1230 = vrot.lane.b32.xlu0 %v1178, 16
        %v1231 = vpop.permute.xlu0 %1230
        %1232 = vrot.lane.b32.xlu0 %v1182, 16
        %v1233 = vpop.permute.xlu0 %1232
        %v1234 = vsel %vm576, %v1231, %v1233
        %v1235 = vsel %vm576, %v1233, %v1231
        %s1236 = scalar_lea.vmem [#allocation11], 2
        %v1237 = vld [vmem:[%s1236] ss:$8 sm:$0x3]
        %v1239 = vlaneseq
        %v1240 = vshrl.u32 %v1239, 7
        %v1241 = vsub.s32 0, %v1240
        %v1242 = vrot.slane %v1237, %v1241
        %v1243 = vlaneseq
        %v1244 = vshrl.u32 %v1243, 7
        %v1245 = vsub.s32 1, %v1244
        %v1246 = vrot.slane %v1237, %v1245
        %v1249 = vmul.f32 %v1235, %v1242
        %v1250 = vmul.f32 %v1234, %v1246
        %v1251 = vadd.f32 %v1228, %v1249
        %v1252 = vadd.f32 %v1229, %v1250
        %s1253 = scalar_lea.vmem [#allocation11], 3
        %v1254 = vld [vmem:[%s1253] ss:$8 sm:$0x3]
        %v1255 = vmul.f32 %v1173, %v1254
        %v1257 = vlaneseq
        %v1258 = vshrl.u32 %v1257, 7
        %v1259 = vsub.s32 0, %v1258
        %v1260 = vrot.slane %v1255, %v1259
        %v1261 = vlaneseq
        %v1262 = vshrl.u32 %v1261, 7
        %v1263 = vsub.s32 1, %v1262
        %v1264 = vrot.slane %v1255, %v1263
        %v1267 = vadd.f32 %v1251, %v1260
        %v1268 = vadd.f32 %v1252, %v1264
        %1269 = vrot.lane.b32.xlu0 %v1178, 112
        %v1270 = vpop.permute.xlu0 %1269
        %1271 = vrot.lane.b32.xlu0 %v1182, 112
        %v1272 = vpop.permute.xlu0 %1271
        %v1273 = vsel %vm713, %v1270, %v1272
        %v1274 = vsel %vm713, %v1272, %v1270
        %s1275 = scalar_lea.vmem [#allocation11], 4
        %v1276 = vld [vmem:[%s1275] ss:$8 sm:$0x3]
        %v1278 = vlaneseq
        %v1279 = vshrl.u32 %v1278, 7
        %v1280 = vsub.s32 0, %v1279
        %v1281 = vrot.slane %v1276, %v1280
        %v1282 = vlaneseq
        %v1283 = vshrl.u32 %v1282, 7
        %v1284 = vsub.s32 1, %v1283
        %v1285 = vrot.slane %v1276, %v1284
        %v1288 = vmul.f32 %v1273, %v1281
        %v1289 = vmul.f32 %v1274, %v1285
        %v1290 = vadd.f32 %v1267, %v1288
        %v1291 = vadd.f32 %v1268, %v1289
        %1292 = vrot.lane.b32.xlu0 %v1178, 96
        %v1293 = vpop.permute.xlu0 %1292
        %1294 = vrot.lane.b32.xlu0 %v1182, 96
        %v1295 = vpop.permute.xlu0 %1294
        %vm1296 = vcmp.lt.s32.totalorder %v552, 96
        %v1297 = vsel %vm1296, %v1293, %v1295
        %v1298 = vsel %vm1296, %v1295, %v1293
        %s1299 = scalar_lea.vmem [#allocation11], 5
        %v1300 = vld [vmem:[%s1299] ss:$8 sm:$0x3]
        %v1302 = vlaneseq
        %v1303 = vshrl.u32 %v1302, 7
        %v1304 = vsub.s32 0, %v1303
        %v1305 = vrot.slane %v1300, %v1304
        %v1306 = vlaneseq
        %v1307 = vshrl.u32 %v1306, 7
        %v1308 = vsub.s32 1, %v1307
        %v1309 = vrot.slane %v1300, %v1308
        %v1312 = vmul.f32 %v1297, %v1305
        %v1313 = vmul.f32 %v1298, %v1309
        %v1314 = vadd.f32 %v1290, %v1312
        %v1315 = vadd.f32 %v1291, %v1313
        %1316 = vrot.lane.b32.xlu0 %v1178, 80
        %v1317 = vpop.permute.xlu0 %1316
        %1318 = vrot.lane.b32.xlu0 %v1182, 80
        %v1319 = vpop.permute.xlu0 %1318
        %vm1320 = vcmp.lt.s32.totalorder %v552, 80
        %v1321 = vsel %vm1320, %v1317, %v1319
        %v1322 = vsel %vm1320, %v1319, %v1317
        %s1323 = scalar_lea.vmem [#allocation11], 6
        %v1324 = vld [vmem:[%s1323] ss:$8 sm:$0x3]
        %v1326 = vlaneseq
        %v1327 = vshrl.u32 %v1326, 7
        %v1328 = vsub.s32 0, %v1327
        %v1329 = vrot.slane %v1324, %v1328
        %v1330 = vlaneseq
        %v1331 = vshrl.u32 %v1330, 7
        %v1332 = vsub.s32 1, %v1331
        %v1333 = vrot.slane %v1324, %v1332
        %v1336 = vmul.f32 %v1321, %v1329
        %v1337 = vmul.f32 %v1322, %v1333
        %v1338 = vadd.f32 %v1314, %v1336
        %v1339 = vadd.f32 %v1315, %v1337
        %1340 = vrot.lane.b32.xlu0 %v1338, 3
        %v1341 = vpop.permute.xlu0 %1340
        %1342 = vrot.lane.b32.xlu0 %v1339, 3
        %v1343 = vpop.permute.xlu0 %1342
        %vm1344 = vcmp.lt.s32.totalorder %v552, 3
        %v1345 = vsel %vm1344, %v1341, %v1343
        %v1346 = vsel %vm1344, %v1343, %v1341
        %v1347 = vld [vmem:[%s8] ss:$8 sm:$0x3]
        %v1349 = vlaneseq
        %v1350 = vshrl.u32 %v1349, 7
        %v1351 = vsub.s32 0, %v1350
        %v1352 = vrot.slane %v1347, %v1351
        %v1353 = vlaneseq
        %v1354 = vshrl.u32 %v1353, 7
        %v1355 = vsub.s32 1, %v1354
        %v1356 = vrot.slane %v1347, %v1355
        %v1359 = vmul.f32 %v1346, %v1352
        %v1360 = vmul.f32 %v1345, %v1356
        %1361 = vrot.lane.b32.xlu0 %v1338, 2
        %v1362 = vpop.permute.xlu0 %1361
        %1363 = vrot.lane.b32.xlu0 %v1339, 2
        %v1364 = vpop.permute.xlu0 %1363
        %vm1365 = vcmp.lt.s32.totalorder %v552, 2
        %v1366 = vsel %vm1365, %v1362, %v1364
        %v1367 = vsel %vm1365, %v1364, %v1362
        %s1368 = scalar_lea.vmem %s8, 1
        %v1369 = vld [vmem:[%s1368] ss:$8 sm:$0x3]
        %v1371 = vlaneseq
        %v1372 = vshrl.u32 %v1371, 7
        %v1373 = vsub.s32 0, %v1372
        %v1374 = vrot.slane %v1369, %v1373
        %v1375 = vlaneseq
        %v1376 = vshrl.u32 %v1375, 7
        %v1377 = vsub.s32 1, %v1376
        %v1378 = vrot.slane %v1369, %v1377
        %v1381 = vmul.f32 %v1367, %v1374
        %v1382 = vmul.f32 %v1366, %v1378
        %v1383 = vadd.f32 %v1359, %v1381
        %v1384 = vadd.f32 %v1360, %v1382
        %1385 = vrot.lane.b32.xlu0 %v1338, 1
        %v1386 = vpop.permute.xlu0 %1385
        %1387 = vrot.lane.b32.xlu0 %v1339, 1
        %v1388 = vpop.permute.xlu0 %1387
        %v1389 = vsel %vm624, %v1386, %v1388
        %v1390 = vsel %vm624, %v1388, %v1386
        %s1391 = scalar_lea.vmem %s8, 2
        %v1392 = vld [vmem:[%s1391] ss:$8 sm:$0x3]
        %v1394 = vlaneseq
        %v1395 = vshrl.u32 %v1394, 7
        %v1396 = vsub.s32 0, %v1395
        %v1397 = vrot.slane %v1392, %v1396
        %v1398 = vlaneseq
        %v1399 = vshrl.u32 %v1398, 7
        %v1400 = vsub.s32 1, %v1399
        %v1401 = vrot.slane %v1392, %v1400
        %v1404 = vmul.f32 %v1390, %v1397
        %v1405 = vmul.f32 %v1389, %v1401
        %v1406 = vadd.f32 %v1383, %v1404
        %v1407 = vadd.f32 %v1384, %v1405
        %s1408 = scalar_lea.vmem %s8, 3
        %v1409 = vld [vmem:[%s1408] ss:$8 sm:$0x3]
        %v1411 = vlaneseq
        %v1412 = vshrl.u32 %v1411, 7
        %v1413 = vsub.s32 0, %v1412
        %v1414 = vrot.slane %v1409, %v1413
        %v1415 = vlaneseq
        %v1416 = vshrl.u32 %v1415, 7
        %v1417 = vsub.s32 1, %v1416
        %v1418 = vrot.slane %v1409, %v1417
        %v1421 = vmul.f32 %v1338, %v1414
        %v1422 = vmul.f32 %v1339, %v1418
        %v1423 = vadd.f32 %v1406, %v1421
        %v1424 = vadd.f32 %v1407, %v1422
        %1425 = vrot.lane.b32.xlu0 %v1338, 127
        %v1426 = vpop.permute.xlu0 %1425
        %1427 = vrot.lane.b32.xlu0 %v1339, 127
        %v1428 = vpop.permute.xlu0 %1427
        %v1429 = vsel %vm665, %v1426, %v1428
        %v1430 = vsel %vm665, %v1428, %v1426
        %s1431 = scalar_lea.vmem %s8, 4
        %v1432 = vld [vmem:[%s1431] ss:$8 sm:$0x3]
        %v1434 = vlaneseq
        %v1435 = vshrl.u32 %v1434, 7
        %v1436 = vsub.s32 0, %v1435
        %v1437 = vrot.slane %v1432, %v1436
        %v1438 = vlaneseq
        %v1439 = vshrl.u32 %v1438, 7
        %v1440 = vsub.s32 1, %v1439
        %v1441 = vrot.slane %v1432, %v1440
        %v1444 = vmul.f32 %v1429, %v1437
        %v1445 = vmul.f32 %v1430, %v1441
        %v1446 = vadd.f32 %v1423, %v1444
        %v1447 = vadd.f32 %v1424, %v1445
        %1448 = vrot.lane.b32.xlu0 %v1338, 126
        %v1449 = vpop.permute.xlu0 %1448
        %1450 = vrot.lane.b32.xlu0 %v1339, 126
        %v1451 = vpop.permute.xlu0 %1450
        %vm1452 = vcmp.lt.s32.totalorder %v552, 126
        %v1453 = vsel %vm1452, %v1449, %v1451
        %v1454 = vsel %vm1452, %v1451, %v1449
        %s1455 = scalar_lea.vmem %s8, 5
        %v1456 = vld [vmem:[%s1455] ss:$8 sm:$0x3]
        %v1458 = vlaneseq
        %v1459 = vshrl.u32 %v1458, 7
        %v1460 = vsub.s32 0, %v1459
        %v1461 = vrot.slane %v1456, %v1460
        %v1462 = vlaneseq
        %v1463 = vshrl.u32 %v1462, 7
        %v1464 = vsub.s32 1, %v1463
        %v1465 = vrot.slane %v1456, %v1464
        %v1468 = vmul.f32 %v1453, %v1461
        %v1469 = vmul.f32 %v1454, %v1465
        %v1470 = vadd.f32 %v1446, %v1468
        %v1471 = vadd.f32 %v1447, %v1469
        %1472 = vrot.lane.b32.xlu0 %v1338, 125
        %v1473 = vpop.permute.xlu0 %1472
        %1474 = vrot.lane.b32.xlu0 %v1339, 125
        %v1475 = vpop.permute.xlu0 %1474
        %vm1476 = vcmp.lt.s32.totalorder %v552, 125
        %v1477 = vsel %vm1476, %v1473, %v1475
        %v1478 = vsel %vm1476, %v1475, %v1473
        %s1479 = scalar_lea.vmem %s8, 6
        %v1480 = vld [vmem:[%s1479] ss:$8 sm:$0x3]
        %v1482 = vlaneseq
        %v1483 = vshrl.u32 %v1482, 7
        %v1484 = vsub.s32 0, %v1483
        %v1485 = vrot.slane %v1480, %v1484
        %v1486 = vlaneseq
        %v1487 = vshrl.u32 %v1486, 7
        %v1488 = vsub.s32 1, %v1487
        %v1489 = vrot.slane %v1480, %v1488
        %v1492 = vmul.f32 %v1477, %v1485
        %v1493 = vmul.f32 %v1478, %v1489
        %v1494 = vadd.f32 %v1470, %v1492
        %v1495 = vadd.f32 %v1471, %v1493
        %v1496 = vsub.f32 %v1146, %v1494
        %v1497 = vsub.f32 %v1148, %v1495
        %v1498 = vmul.f32 %v1496, %v1496
        %v1499 = vmul.f32 %v1497, %v1497
        %vm1500 = vcmask 1040384
        %v1501 = vsel %vm1500, %v1498, 0.0
        %v1502 = vsel %vm1500, %v1499, 0.0
        %v1503 = vadd.f32 %v1501, %v1502
        %1504 = vadd.xlane.f32.xlu0 %v1503
        %v1505 = vpop.xlane.xlu0 %1504
        %v1506 = vrot.slane %v1505, 4
        %v1507 = vadd.f32 %v1505, %v1506
        %v1508 = vrot.slane %v1507, 2
        %v1509 = vadd.f32 %v1507, %v1508
        %v1510 = vrot.slane %v1509, 1
        %v1511 = vadd.f32 %v1509, %v1510
        %s1512 = vtos %v1511
        %1513 = vst.msk [vmem:[#allocation2] ss:$8 sm:$0x3] %vm1171, %v1166
        %1514 = vst.msk [vmem:[#allocation2] ss:$8 sm:$0x0] %vm1171, %v1166
        %v1517 = vcombine.low %v1494, %v1495
        %v1519 = vunpack.c.l.s4 1966171168
        %v1520 = vunpack.c.0.s8 %v1519
        %v1521 = vlaneseq
        %v1522 = vshrl.u32 %v1521, 7
        %v1523 = vsub.s32 %v1520, %v1522
        %v1524 = vrot.slane %v1517, %v1523
        %v1526 = vunpack.c.l.s4 1966171168
        %v1527 = vunpack.c.0.s8 %v1526
        %v1528 = vlaneseq
        %v1529 = vshrl.u32 %v1528, 7
        %v1530 = vsub.s32 %v1527, %v1529
        %v1531 = vrot.slane %v1524, %v1530
        %s1533 = scalar_lea.vmem [#allocation2], 1
        %1534 = vst.msk [vmem:[%s1533] ss:$8 sm:$0x3] %vm1171, %v1531
        %1535 = vst.msk [vmem:[%s1533] ss:$8 sm:$0x0] %vm1171, %v1531
        %v1536 = vmul.f32 %v1146, %v1146
        %v1537 = vmul.f32 %v1148, %v1148
        %v1540 = vcombine.low %v1536, %v1537
        %v1542 = vunpack.c.l.s4 1966171168
        %v1543 = vunpack.c.0.s8 %v1542
        %v1544 = vlaneseq
        %v1545 = vshrl.u32 %v1544, 7
        %v1546 = vsub.s32 %v1543, %v1545
        %v1547 = vrot.slane %v1540, %v1546
        %v1549 = vunpack.c.l.s4 1966171168
        %v1550 = vunpack.c.0.s8 %v1549
        %v1551 = vlaneseq
        %v1552 = vshrl.u32 %v1551, 7
        %v1553 = vsub.s32 %v1550, %v1552
        %v1554 = vrot.slane %v1547, %v1553
        %s1556 = scalar_lea.vmem [#allocation2], 2
        %1557 = vst.msk [vmem:[%s1556] ss:$8 sm:$0x3] %vm1171, %v1554
        %1558 = vst.msk [vmem:[%s1556] ss:$8 sm:$0x0] %vm1171, %v1554
        %v1559 = vmul.f32 %v1494, %v1494
        %v1560 = vmul.f32 %v1495, %v1495
        %v1563 = vcombine.low %v1559, %v1560
        %v1565 = vunpack.c.l.s4 1966171168
        %v1566 = vunpack.c.0.s8 %v1565
        %v1567 = vlaneseq
        %v1568 = vshrl.u32 %v1567, 7
        %v1569 = vsub.s32 %v1566, %v1568
        %v1570 = vrot.slane %v1563, %v1569
        %v1572 = vunpack.c.l.s4 1966171168
        %v1573 = vunpack.c.0.s8 %v1572
        %v1574 = vlaneseq
        %v1575 = vshrl.u32 %v1574, 7
        %v1576 = vsub.s32 %v1573, %v1575
        %v1577 = vrot.slane %v1570, %v1576
        %s1579 = scalar_lea.vmem [#allocation2], 3
        %1580 = vst.msk [vmem:[%s1579] ss:$8 sm:$0x3] %vm1171, %v1577
        %1581 = vst.msk [vmem:[%s1579] ss:$8 sm:$0x0] %vm1171, %v1577
        %v1582 = vmul.f32 %v1146, %v1494
        %v1583 = vmul.f32 %v1148, %v1495
        %v1586 = vcombine.low %v1582, %v1583
        %v1588 = vunpack.c.l.s4 1966171168
        %v1589 = vunpack.c.0.s8 %v1588
        %v1590 = vlaneseq
        %v1591 = vshrl.u32 %v1590, 7
        %v1592 = vsub.s32 %v1589, %v1591
        %v1593 = vrot.slane %v1586, %v1592
        %v1595 = vunpack.c.l.s4 1966171168
        %v1596 = vunpack.c.0.s8 %v1595
        %v1597 = vlaneseq
        %v1598 = vshrl.u32 %v1597, 7
        %v1599 = vsub.s32 %v1596, %v1598
        %v1600 = vrot.slane %v1593, %v1599
        %s1602 = scalar_lea.vmem [#allocation2], 4
        %1603 = vst.msk [vmem:[%s1602] ss:$8 sm:$0x3] %vm1171, %v1600
        %1604 = vst.msk [vmem:[%s1602] ss:$8 sm:$0x0] %vm1171, %v1600
        %v1605 = vld [vmem:[#allocation2] sm:$0xff]
        %v1606 = vld [vmem:[#allocation2 + $0x8] sm:$0xff]
        %1607 = vrot.lane.b32.xlu0 %v1605, 80
        %v1608 = vpop.permute.xlu0 %1607
        %1609 = vrot.lane.b32.xlu0 %v1606, 80
        %v1610 = vpop.permute.xlu0 %1609
        %v1611 = vsel %vm1320, %v1608, %v1610
        %v1612 = vsel %vm1320, %v1610, %v1608
        %v1613 = vld [vmem:[#allocation12] ss:$8 sm:$0x3]
        %v1615 = vlaneseq
        %v1616 = vshrl.u32 %v1615, 7
        %v1617 = vsub.s32 0, %v1616
        %v1618 = vrot.slane %v1613, %v1617
        %v1619 = vlaneseq
        %v1620 = vshrl.u32 %v1619, 7
        %v1621 = vsub.s32 1, %v1620
        %v1622 = vrot.slane %v1613, %v1621
        %v1625 = vmul.f32 %v1612, %v1618
        %v1626 = vmul.f32 %v1611, %v1622
        %1627 = vrot.lane.b32.xlu0 %v1605, 64
        %v1628 = vpop.permute.xlu0 %1627
        %1629 = vrot.lane.b32.xlu0 %v1606, 64
        %v1630 = vpop.permute.xlu0 %1629
        %vm1631 = vcmp.lt.s32.totalorder %v552, 64
        %v1632 = vsel %vm1631, %v1628, %v1630
        %v1633 = vsel %vm1631, %v1630, %v1628
        %s1634 = scalar_lea.vmem [#allocation12], 1
        %v1635 = vld [vmem:[%s1634] ss:$8 sm:$0x3]
        %v1637 = vlaneseq
        %v1638 = vshrl.u32 %v1637, 7
        %v1639 = vsub.s32 0, %v1638
        %v1640 = vrot.slane %v1635, %v1639
        %v1641 = vlaneseq
        %v1642 = vshrl.u32 %v1641, 7
        %v1643 = vsub.s32 1, %v1642
        %v1644 = vrot.slane %v1635, %v1643
        %v1647 = vmul.f32 %v1633, %v1640
        %v1648 = vmul.f32 %v1632, %v1644
        %v1649 = vadd.f32 %v1625, %v1647
        %v1650 = vadd.f32 %v1626, %v1648
        %1651 = vrot.lane.b32.xlu0 %v1605, 48
        %v1652 = vpop.permute.xlu0 %1651
        %1653 = vrot.lane.b32.xlu0 %v1606, 48
        %v1654 = vpop.permute.xlu0 %1653
        %v1655 = vsel %vm1189, %v1652, %v1654
        %v1656 = vsel %vm1189, %v1654, %v1652
        %s1657 = scalar_lea.vmem [#allocation12], 2
        %v1658 = vld [vmem:[%s1657] ss:$8 sm:$0x3]
        %v1660 = vlaneseq
        %v1661 = vshrl.u32 %v1660, 7
        %v1662 = vsub.s32 0, %v1661
        %v1663 = vrot.slane %v1658, %v1662
        %v1664 = vlaneseq
        %v1665 = vshrl.u32 %v1664, 7
        %v1666 = vsub.s32 1, %v1665
        %v1667 = vrot.slane %v1658, %v1666
        %v1670 = vmul.f32 %v1656, %v1663
        %v1671 = vmul.f32 %v1655, %v1667
        %v1672 = vadd.f32 %v1649, %v1670
        %v1673 = vadd.f32 %v1650, %v1671
        %1674 = vrot.lane.b32.xlu0 %v1605, 32
        %v1675 = vpop.permute.xlu0 %1674
        %1676 = vrot.lane.b32.xlu0 %v1606, 32
        %v1677 = vpop.permute.xlu0 %1676
        %v1678 = vsel %vm1210, %v1675, %v1677
        %v1679 = vsel %vm1210, %v1677, %v1675
        %s1680 = scalar_lea.vmem [#allocation12], 3
        %v1681 = vld [vmem:[%s1680] ss:$8 sm:$0x3]
        %v1683 = vlaneseq
        %v1684 = vshrl.u32 %v1683, 7
        %v1685 = vsub.s32 0, %v1684
        %v1686 = vrot.slane %v1681, %v1685
        %v1687 = vlaneseq
        %v1688 = vshrl.u32 %v1687, 7
        %v1689 = vsub.s32 1, %v1688
        %v1690 = vrot.slane %v1681, %v1689
        %v1693 = vmul.f32 %v1679, %v1686
        %v1694 = vmul.f32 %v1678, %v1690
        %v1695 = vadd.f32 %v1672, %v1693
        %v1696 = vadd.f32 %v1673, %v1694
        %1697 = vrot.lane.b32.xlu0 %v1605, 16
        %v1698 = vpop.permute.xlu0 %1697
        %1699 = vrot.lane.b32.xlu0 %v1606, 16
        %v1700 = vpop.permute.xlu0 %1699
        %v1701 = vsel %vm576, %v1698, %v1700
        %v1702 = vsel %vm576, %v1700, %v1698
        %s1703 = scalar_lea.vmem [#allocation12], 4
        %v1704 = vld [vmem:[%s1703] ss:$8 sm:$0x3]
        %v1706 = vlaneseq
        %v1707 = vshrl.u32 %v1706, 7
        %v1708 = vsub.s32 0, %v1707
        %v1709 = vrot.slane %v1704, %v1708
        %v1710 = vlaneseq
        %v1711 = vshrl.u32 %v1710, 7
        %v1712 = vsub.s32 1, %v1711
        %v1713 = vrot.slane %v1704, %v1712
        %v1716 = vmul.f32 %v1702, %v1709
        %v1717 = vmul.f32 %v1701, %v1713
        %v1718 = vadd.f32 %v1695, %v1716
        %v1719 = vadd.f32 %v1696, %v1717
        %s1720 = scalar_lea.vmem [#allocation12], 5
        %v1721 = vld [vmem:[%s1720] ss:$8 sm:$0x3]
        %v1723 = vlaneseq
        %v1724 = vshrl.u32 %v1723, 7
        %v1725 = vsub.s32 0, %v1724
        %v1726 = vrot.slane %v1721, %v1725
        %v1727 = vlaneseq
        %v1728 = vshrl.u32 %v1727, 7
        %v1729 = vsub.s32 1, %v1728
        %v1730 = vrot.slane %v1721, %v1729
        %v1733 = vmul.f32 %v1605, %v1726
        %v1734 = vmul.f32 %v1606, %v1730
        %v1735 = vadd.f32 %v1718, %v1733
        %v1736 = vadd.f32 %v1719, %v1734
        %1737 = vrot.lane.b32.xlu0 %v1605, 112
        %v1738 = vpop.permute.xlu0 %1737
        %1739 = vrot.lane.b32.xlu0 %v1606, 112
        %v1740 = vpop.permute.xlu0 %1739
        %v1741 = vsel %vm713, %v1738, %v1740
        %v1742 = vsel %vm713, %v1740, %v1738
        %s1743 = scalar_lea.vmem [#allocation12], 6
        %v1744 = vld [vmem:[%s1743] ss:$8 sm:$0x3]
        %v1746 = vlaneseq
        %v1747 = vshrl.u32 %v1746, 7
        %v1748 = vsub.s32 0, %v1747
        %v1749 = vrot.slane %v1744, %v1748
        %v1750 = vlaneseq
        %v1751 = vshrl.u32 %v1750, 7
        %v1752 = vsub.s32 1, %v1751
        %v1753 = vrot.slane %v1744, %v1752
        %v1756 = vmul.f32 %v1741, %v1749
        %v1757 = vmul.f32 %v1742, %v1753
        %v1758 = vadd.f32 %v1735, %v1756
        %v1759 = vadd.f32 %v1736, %v1757
        %1760 = vrot.lane.b32.xlu0 %v1605, 96
        %v1761 = vpop.permute.xlu0 %1760
        %1762 = vrot.lane.b32.xlu0 %v1606, 96
        %v1763 = vpop.permute.xlu0 %1762
        %v1764 = vsel %vm1296, %v1761, %v1763
        %v1765 = vsel %vm1296, %v1763, %v1761
        %s1766 = scalar_lea.vmem [#allocation12], 7
        %v1767 = vld [vmem:[%s1766] ss:$8 sm:$0x3]
        %v1769 = vlaneseq
        %v1770 = vshrl.u32 %v1769, 7
        %v1771 = vsub.s32 0, %v1770
        %v1772 = vrot.slane %v1767, %v1771
        %v1773 = vlaneseq
        %v1774 = vshrl.u32 %v1773, 7
        %v1775 = vsub.s32 1, %v1774
        %v1776 = vrot.slane %v1767, %v1775
        %v1779 = vmul.f32 %v1764, %v1772
        %v1780 = vmul.f32 %v1765, %v1776
        %v1781 = vadd.f32 %v1758, %v1779
        %v1782 = vadd.f32 %v1759, %v1780
        %s1783 = scalar_lea.vmem [#allocation12], 16
        %v1784 = vld [vmem:[%s1783] ss:$8 sm:$0x3]
        %v1786 = vlaneseq
        %v1787 = vshrl.u32 %v1786, 7
        %v1788 = vsub.s32 0, %v1787
        %v1789 = vrot.slane %v1784, %v1788
        %v1790 = vlaneseq
        %v1791 = vshrl.u32 %v1790, 7
        %v1792 = vsub.s32 1, %v1791
        %v1793 = vrot.slane %v1784, %v1792
        %v1796 = vmul.f32 %v1611, %v1789
        %v1797 = vmul.f32 %v1612, %v1793
        %v1798 = vadd.f32 %v1781, %v1796
        %v1799 = vadd.f32 %v1782, %v1797
        %s1800 = scalar_lea.vmem [#allocation12], 17
        %v1801 = vld [vmem:[%s1800] ss:$8 sm:$0x3]
        %v1803 = vlaneseq
        %v1804 = vshrl.u32 %v1803, 7
        %v1805 = vsub.s32 0, %v1804
        %v1806 = vrot.slane %v1801, %v1805
        %v1807 = vlaneseq
        %v1808 = vshrl.u32 %v1807, 7
        %v1809 = vsub.s32 1, %v1808
        %v1810 = vrot.slane %v1801, %v1809
        %v1813 = vmul.f32 %v1632, %v1806
        %v1814 = vmul.f32 %v1633, %v1810
        %v1815 = vadd.f32 %v1798, %v1813
        %v1816 = vadd.f32 %v1799, %v1814
        %s1817 = scalar_lea.vmem [#allocation12], 18
        %v1818 = vld [vmem:[%s1817] ss:$8 sm:$0x3]
        %v1820 = vlaneseq
        %v1821 = vshrl.u32 %v1820, 7
        %v1822 = vsub.s32 0, %v1821
        %v1823 = vrot.slane %v1818, %v1822
        %v1824 = vlaneseq
        %v1825 = vshrl.u32 %v1824, 7
        %v1826 = vsub.s32 1, %v1825
        %v1827 = vrot.slane %v1818, %v1826
        %v1830 = vmul.f32 %v1655, %v1823
        %v1831 = vmul.f32 %v1656, %v1827
        %v1832 = vadd.f32 %v1815, %v1830
        %v1833 = vadd.f32 %v1816, %v1831
        %1834 = vrot.lane.b32.xlu0 %v1832, 5
        %v1835 = vpop.permute.xlu0 %1834
        %1836 = vrot.lane.b32.xlu0 %v1833, 5
        %v1837 = vpop.permute.xlu0 %1836
        %vm1838 = vcmp.lt.s32.totalorder %v552, 5
        %v1839 = vsel %vm1838, %v1835, %v1837
        %v1840 = vsel %vm1838, %v1837, %v1835
        %v1841 = vld [vmem:[#allocation14] ss:$8 sm:$0x3]
        %v1843 = vlaneseq
        %v1844 = vshrl.u32 %v1843, 7
        %v1845 = vsub.s32 0, %v1844
        %v1846 = vrot.slane %v1841, %v1845
        %v1847 = vlaneseq
        %v1848 = vshrl.u32 %v1847, 7
        %v1849 = vsub.s32 1, %v1848
        %v1850 = vrot.slane %v1841, %v1849
        %v1853 = vmul.f32 %v1840, %v1846
        %v1854 = vmul.f32 %v1839, %v1850
        %1855 = vrot.lane.b32.xlu0 %v1832, 4
        %v1856 = vpop.permute.xlu0 %1855
        %1857 = vrot.lane.b32.xlu0 %v1833, 4
        %v1858 = vpop.permute.xlu0 %1857
        %vm1859 = vcmp.lt.s32.totalorder %v552, 4
        %v1860 = vsel %vm1859, %v1856, %v1858
        %v1861 = vsel %vm1859, %v1858, %v1856
        %s1862 = scalar_lea.vmem [#allocation14], 1
        %v1863 = vld [vmem:[%s1862] ss:$8 sm:$0x3]
        %v1865 = vlaneseq
        %v1866 = vshrl.u32 %v1865, 7
        %v1867 = vsub.s32 0, %v1866
        %v1868 = vrot.slane %v1863, %v1867
        %v1869 = vlaneseq
        %v1870 = vshrl.u32 %v1869, 7
        %v1871 = vsub.s32 1, %v1870
        %v1872 = vrot.slane %v1863, %v1871
        %v1875 = vmul.f32 %v1861, %v1868
        %v1876 = vmul.f32 %v1860, %v1872
        %v1877 = vadd.f32 %v1853, %v1875
        %v1878 = vadd.f32 %v1854, %v1876
        %1879 = vrot.lane.b32.xlu0 %v1832, 3
        %v1880 = vpop.permute.xlu0 %1879
        %1881 = vrot.lane.b32.xlu0 %v1833, 3
        %v1882 = vpop.permute.xlu0 %1881
        %v1883 = vsel %vm1344, %v1880, %v1882
        %v1884 = vsel %vm1344, %v1882, %v1880
        %s1885 = scalar_lea.vmem [#allocation14], 2
        %v1886 = vld [vmem:[%s1885] ss:$8 sm:$0x3]
        %v1888 = vlaneseq
        %v1889 = vshrl.u32 %v1888, 7
        %v1890 = vsub.s32 0, %v1889
        %v1891 = vrot.slane %v1886, %v1890
        %v1892 = vlaneseq
        %v1893 = vshrl.u32 %v1892, 7
        %v1894 = vsub.s32 1, %v1893
        %v1895 = vrot.slane %v1886, %v1894
        %v1898 = vmul.f32 %v1884, %v1891
        %v1899 = vmul.f32 %v1883, %v1895
        %v1900 = vadd.f32 %v1877, %v1898
        %v1901 = vadd.f32 %v1878, %v1899
        %1902 = vrot.lane.b32.xlu0 %v1832, 2
        %v1903 = vpop.permute.xlu0 %1902
        %1904 = vrot.lane.b32.xlu0 %v1833, 2
        %v1905 = vpop.permute.xlu0 %1904
        %v1906 = vsel %vm1365, %v1903, %v1905
        %v1907 = vsel %vm1365, %v1905, %v1903
        %s1908 = scalar_lea.vmem [#allocation14], 3
        %v1909 = vld [vmem:[%s1908] ss:$8 sm:$0x3]
        %v1911 = vlaneseq
        %v1912 = vshrl.u32 %v1911, 7
        %v1913 = vsub.s32 0, %v1912
        %v1914 = vrot.slane %v1909, %v1913
        %v1915 = vlaneseq
        %v1916 = vshrl.u32 %v1915, 7
        %v1917 = vsub.s32 1, %v1916
        %v1918 = vrot.slane %v1909, %v1917
        %v1921 = vmul.f32 %v1907, %v1914
        %v1922 = vmul.f32 %v1906, %v1918
        %v1923 = vadd.f32 %v1900, %v1921
        %v1924 = vadd.f32 %v1901, %v1922
        %1925 = vrot.lane.b32.xlu0 %v1832, 1
        %v1926 = vpop.permute.xlu0 %1925
        %1927 = vrot.lane.b32.xlu0 %v1833, 1
        %v1928 = vpop.permute.xlu0 %1927
        %v1929 = vsel %vm624, %v1926, %v1928
        %v1930 = vsel %vm624, %v1928, %v1926
        %s1931 = scalar_lea.vmem [#allocation14], 4
        %v1932 = vld [vmem:[%s1931] ss:$8 sm:$0x3]
        %v1934 = vlaneseq
        %v1935 = vshrl.u32 %v1934, 7
        %v1936 = vsub.s32 0, %v1935
        %v1937 = vrot.slane %v1932, %v1936
        %v1938 = vlaneseq
        %v1939 = vshrl.u32 %v1938, 7
        %v1940 = vsub.s32 1, %v1939
        %v1941 = vrot.slane %v1932, %v1940
        %v1944 = vmul.f32 %v1930, %v1937
        %v1945 = vmul.f32 %v1929, %v1941
        %v1946 = vadd.f32 %v1923, %v1944
        %v1947 = vadd.f32 %v1924, %v1945
        %s1948 = scalar_lea.vmem [#allocation14], 5
        %v1949 = vld [vmem:[%s1948] ss:$8 sm:$0x3]
        %v1951 = vlaneseq
        %v1952 = vshrl.u32 %v1951, 7
        %v1953 = vsub.s32 0, %v1952
        %v1954 = vrot.slane %v1949, %v1953
        %v1955 = vlaneseq
        %v1956 = vshrl.u32 %v1955, 7
        %v1957 = vsub.s32 1, %v1956
        %v1958 = vrot.slane %v1949, %v1957
        %v1961 = vmul.f32 %v1832, %v1954
        %v1962 = vmul.f32 %v1833, %v1958
        %v1963 = vadd.f32 %v1946, %v1961
        %v1964 = vadd.f32 %v1947, %v1962
        %1965 = vrot.lane.b32.xlu0 %v1832, 127
        %v1966 = vpop.permute.xlu0 %1965
        %1967 = vrot.lane.b32.xlu0 %v1833, 127
        %v1968 = vpop.permute.xlu0 %1967
        %v1969 = vsel %vm665, %v1966, %v1968
        %v1970 = vsel %vm665, %v1968, %v1966
        %s1971 = scalar_lea.vmem [#allocation14], 6
        %v1972 = vld [vmem:[%s1971] ss:$8 sm:$0x3]
        %v1974 = vlaneseq
        %v1975 = vshrl.u32 %v1974, 7
        %v1976 = vsub.s32 0, %v1975
        %v1977 = vrot.slane %v1972, %v1976
        %v1978 = vlaneseq
        %v1979 = vshrl.u32 %v1978, 7
        %v1980 = vsub.s32 1, %v1979
        %v1981 = vrot.slane %v1972, %v1980
        %v1984 = vmul.f32 %v1969, %v1977
        %v1985 = vmul.f32 %v1970, %v1981
        %v1986 = vadd.f32 %v1963, %v1984
        %v1987 = vadd.f32 %v1964, %v1985
        %1988 = vrot.lane.b32.xlu0 %v1832, 126
        %v1989 = vpop.permute.xlu0 %1988
        %1990 = vrot.lane.b32.xlu0 %v1833, 126
        %v1991 = vpop.permute.xlu0 %1990
        %v1992 = vsel %vm1452, %v1989, %v1991
        %v1993 = vsel %vm1452, %v1991, %v1989
        %s1994 = scalar_lea.vmem [#allocation14], 7
        %v1995 = vld [vmem:[%s1994] ss:$8 sm:$0x3]
        %v1997 = vlaneseq
        %v1998 = vshrl.u32 %v1997, 7
        %v1999 = vsub.s32 0, %v1998
        %v2000 = vrot.slane %v1995, %v1999
        %v2001 = vlaneseq
        %v2002 = vshrl.u32 %v2001, 7
        %v2003 = vsub.s32 1, %v2002
        %v2004 = vrot.slane %v1995, %v2003
        %v2007 = vmul.f32 %v1992, %v2000
        %v2008 = vmul.f32 %v1993, %v2004
        %v2009 = vadd.f32 %v1986, %v2007
        %v2010 = vadd.f32 %v1987, %v2008
        %2011 = vrot.lane.b32.xlu0 %v1832, 125
        %v2012 = vpop.permute.xlu0 %2011
        %2013 = vrot.lane.b32.xlu0 %v1833, 125
        %v2014 = vpop.permute.xlu0 %2013
        %v2015 = vsel %vm1476, %v2012, %v2014
        %v2016 = vsel %vm1476, %v2014, %v2012
        %s2017 = scalar_lea.vmem [#allocation14], 16
        %v2018 = vld [vmem:[%s2017] ss:$8 sm:$0x3]
        %v2020 = vlaneseq
        %v2021 = vshrl.u32 %v2020, 7
        %v2022 = vsub.s32 0, %v2021
        %v2023 = vrot.slane %v2018, %v2022
        %v2024 = vlaneseq
        %v2025 = vshrl.u32 %v2024, 7
        %v2026 = vsub.s32 1, %v2025
        %v2027 = vrot.slane %v2018, %v2026
        %v2030 = vmul.f32 %v2015, %v2023
        %v2031 = vmul.f32 %v2016, %v2027
        %v2032 = vadd.f32 %v2009, %v2030
        %v2033 = vadd.f32 %v2010, %v2031
        %2034 = vrot.lane.b32.xlu0 %v1832, 124
        %v2035 = vpop.permute.xlu0 %2034
        %2036 = vrot.lane.b32.xlu0 %v1833, 124
        %v2037 = vpop.permute.xlu0 %2036
        %vm2038 = vcmp.lt.s32.totalorder %v552, 124
        %v2039 = vsel %vm2038, %v2035, %v2037
        %v2040 = vsel %vm2038, %v2037, %v2035
        %s2041 = scalar_lea.vmem [#allocation14], 17
        %v2042 = vld [vmem:[%s2041] ss:$8 sm:$0x3]
        %v2044 = vlaneseq
        %v2045 = vshrl.u32 %v2044, 7
        %v2046 = vsub.s32 0, %v2045
        %v2047 = vrot.slane %v2042, %v2046
        %v2048 = vlaneseq
        %v2049 = vshrl.u32 %v2048, 7
        %v2050 = vsub.s32 1, %v2049
        %v2051 = vrot.slane %v2042, %v2050
        %v2054 = vmul.f32 %v2039, %v2047
        %v2055 = vmul.f32 %v2040, %v2051
        %v2056 = vadd.f32 %v2032, %v2054
        %v2057 = vadd.f32 %v2033, %v2055
        %2058 = vrot.lane.b32.xlu0 %v1832, 123
        %v2059 = vpop.permute.xlu0 %2058
        %2060 = vrot.lane.b32.xlu0 %v1833, 123
        %v2061 = vpop.permute.xlu0 %2060
        %vm2062 = vcmp.lt.s32.totalorder %v552, 123
        %v2063 = vsel %vm2062, %v2059, %v2061
        %v2064 = vsel %vm2062, %v2061, %v2059
        %s2065 = scalar_lea.vmem [#allocation14], 18
        %v2066 = vld [vmem:[%s2065] ss:$8 sm:$0x3]
        %v2068 = vlaneseq
        %v2069 = vshrl.u32 %v2068, 7
        %v2070 = vsub.s32 0, %v2069
        %v2071 = vrot.slane %v2066, %v2070
        %v2072 = vlaneseq
        %v2073 = vshrl.u32 %v2072, 7
        %v2074 = vsub.s32 1, %v2073
        %v2075 = vrot.slane %v2066, %v2074
        %v2078 = vmul.f32 %v2063, %v2071
        %v2079 = vmul.f32 %v2064, %v2075
        %v2080 = vadd.f32 %v2056, %v2078
        %v2081 = vadd.f32 %v2057, %v2079
        %v2082 = vmul.f32 %v2080, %v2080
        %v2083 = vmul.f32 %v2081, %v2081
        %v2086 = vrot.slane %v2080, 1
        %v2087 = vrot.slane %v2081, 1
        %v2090 = vmul.f32 %v2080, %v2086
        %v2091 = vmul.f32 %v2081, %v2087
        %v2094 = vrot.slane %v2082, 6
        %v2095 = vrot.slane %v2083, 6
        %v2098 = vsub.f32 %v2080, %v2094
        %v2099 = vsub.f32 %v2081, %v2095
        %v2102 = vrot.slane %v2090, 4
        %v2103 = vrot.slane %v2091, 4
        %v2106 = vsub.f32 %v2080, %v2102
        %v2107 = vsub.f32 %v2081, %v2103
        %v2108 = vmul.f32 %v2090, 2.0
        %v2109 = vmul.f32 %v2091, 2.0
        %v2110 = vadd.f32 %v2108, 0.0001
        %v2111 = vadd.f32 %v2109, 0.0001
        %v2112 = vmul.f32 %v2106, 2.0
        %v2113 = vmul.f32 %v2107, 2.0
        %v2114 = vadd.f32 %v2112, 0.0009
        %v2115 = vadd.f32 %v2113, 0.0009
        %v2118 = vrot.slane %v2114, 4
        %v2119 = vrot.slane %v2115, 4
        %v2122 = vmul.f32 %v2110, %v2118
        %v2123 = vmul.f32 %v2111, %v2119
        %v2124 = vrot.slane %v2082, 1
        %v2125 = vrot.slane %v2083, 1
        %v2128 = vadd.f32 %v2082, %v2124
        %v2129 = vadd.f32 %v2083, %v2125
        %v2130 = vadd.f32 %v2128, 0.0001
        %v2131 = vadd.f32 %v2129, 0.0001
        %v2134 = vrot.slane %v2098, 1
        %v2135 = vrot.slane %v2099, 1
        %v2138 = vadd.f32 %v2098, %v2134
        %v2139 = vadd.f32 %v2099, %v2135
        %v2140 = vadd.f32 %v2138, 0.0009
        %v2141 = vadd.f32 %v2139, 0.0009
        %v2144 = vrot.slane %v2140, 2
        %v2145 = vrot.slane %v2141, 2
        %v2148 = vmul.f32 %v2130, %v2144
        %v2149 = vmul.f32 %v2131, %v2145
        %v2150 = vrcp.pop %v2148
        %v2151 = vmul.f32 %v2122, %v2150
        %v2152 = vrcp.pop %v2149
        %v2153 = vmul.f32 %v2123, %v2152
        %v2154 = vsel %vm1500, %v2151, 0.0
        %v2155 = vsel %vm1500, %v2153, 0.0
        %v2156 = vadd.f32 %v2154, %v2155
        %2157 = vadd.xlane.f32.xlu0 %v2156
        %v2158 = vpop.xlane.xlu0 %2157
        %v2159 = vrot.slane %v2158, 4
        %v2160 = vadd.f32 %v2158, %v2159
        %v2161 = vrot.slane %v2160, 2
        %v2162 = vadd.f32 %v2160, %v2161
        %v2163 = vrot.slane %v2162, 1
        %v2164 = vadd.f32 %v2162, %v2163
        %s2165 = vtos %v2164
        %v2166 = vstv %s1512
        %2167 = vst [vmem:[%s544] sm:$0x1] %v2166
        %v2168 = vstv %s2165
        %2169 = vst [vmem:[%s544 + $0x1] sm:$0x1] %v2168
        %s2170 = sand.u32 %s287, 1
        %s2171 = scalar_lea.sflag [#allocation5], %s2170
        %s2172 = sand.u32 %s287, 1
        %s2173 = smul.addr %s2172, 2
        %s2174 = scalar_lea.vmem [#allocation15], %s2173
        %s2175 = sand.u32 %s313, 1
        %s2176 = scalar_lea.sflag [#allocation17], %s2175
        %s2177 = sand.u32 %s313, 1
        %s2178 = smul.addr %s2177, 2
        %s2179 = scalar_lea.vmem [#allocation16], %s2178
        // Predicated region
        $region93: #{tpu_custom_call.1} parent=63 // pred_check
          %p2180 = pneg %p297
        $region94: #{tpu_custom_call.1} parent=63 // pred_check_branch
          %2182 = sbr.rel (%p2180) target = $region96
        $region95: #{tpu_custom_call.1} parent=63 // pred_region
          %s2184 = ssub.s32 32, 32
          %2185 = vsyncadd %s2171, %s2184
          %s2186 = smul.addr %s38, 2
          %s2187 = smul.addr %s2186, 16
          %s2188 = scalar_lea.hbm %s11, %s2187
          %s2190 = sshll.u32 %s2174, 4
          %s2191 = int_to_ptr.vmem [resolvable:$true] %s2190
          %2193 = dma.vmem_to_hbm [thread:$0]  %s2191, 32, %s2188, %s2171
        $region96: #{tpu_custom_call.1} parent=63 // pred_fallthru
          _
        // Predicated region
        $region97: #{tpu_custom_call.1} parent=63 // pred_check
          %p2194 = pneg %p323
        $region98: #{tpu_custom_call.1} parent=63 // pred_check_branch
          %2196 = sbr.rel (%p2194) target = $region100
        $region99: #{tpu_custom_call.1} parent=63 // pred_region
          %s2198 = ssub.s32 32, 32
          %2199 = vsyncadd %s2176, %s2198
          %s2200 = smul.addr %s38, 32
          %s2201 = scalar_lea.hbm %s12, %s2200
          %s2203 = sshll.u32 %s2179, 4
          %s2204 = int_to_ptr.vmem [resolvable:$true] %s2203
          %2206 = dma.vmem_to_hbm [thread:$0]  %s2204, 32, %s2201, %s2176
        $region100: #{tpu_custom_call.1} parent=63 // pred_fallthru
          _
      $region64: #{tpu_custom_call.1} parent=5 // pred_fallthru
        _
      %p2207 = scmp.le.s32.totalorder 2, %s33
      // Predicated region
      $region101: #{tpu_custom_call.1} parent=5 // pred_check
        %p2208 = pneg %p2207
      $region102: #{tpu_custom_call.1} parent=5 // pred_check_branch
        %2210 = sbr.rel (%p2208) target = $region104
      $region103: #{tpu_custom_call.1} parent=5 // pred_region
        %s2211 = ssub.s32 %s33, 2
        // Predicated region
        $region105: #{tpu_custom_call.1} parent=103 // pred_check
          %p2212 = pneg %p303
        $region106: #{tpu_custom_call.1} parent=103 // pred_check_branch
          %2214 = sbr.rel (%p2212) target = $region108
        $region107: #{tpu_custom_call.1} parent=103 // pred_region
          %s2215 = sand.u32 %s288, 1
          %s2216 = scalar_lea.sflag [#allocation5], %s2215
          %s2217 = sand.u32 %s288, 1
          %s2218 = smul.addr %s2217, 2
          %s2219 = scalar_lea.vmem [#allocation15], %s2218
          %2220 = dma.done %s2216, 32
        $region108: #{tpu_custom_call.1} parent=103 // pred_fallthru
          _
        // Predicated region
        $region109: #{tpu_custom_call.1} parent=103 // pred_check
          %p2221 = pneg %p329
        $region110: #{tpu_custom_call.1} parent=103 // pred_check_branch
          %2223 = sbr.rel (%p2221) target = $region112
        $region111: #{tpu_custom_call.1} parent=103 // pred_region
          %s2224 = sand.u32 %s314, 1
          %s2225 = scalar_lea.sflag [#allocation17], %s2224
          %s2226 = sand.u32 %s314, 1
          %s2227 = smul.addr %s2226, 2
          %s2228 = scalar_lea.vmem [#allocation16], %s2227
          %2229 = dma.done %s2225, 32
        $region112: #{tpu_custom_call.1} parent=103 // pred_fallthru
          _
      $region104: #{tpu_custom_call.1} parent=5 // pred_fallthru
        _
    $region6: #{tpu_custom_call.1} parent=1 // loop_footer
      %s37 = sadd.s32 1, %s33
    $region7: #{tpu_custom_call.1} parent=1 // loop_footer_branch
      %32 = sbr.rel target = $region3
    $region8: #{tpu_custom_call.1} parent=1 // loop_exit
      _
    %2230 = vsyncpa [#allocation4], 1
    %s2231 = scalar_lea.sflag [#allocation4], 1
    %2232 = vsyncpa %s2231, 1
    %2233 = vsyncpa [#allocation7], 1
    %s2234 = scalar_lea.sflag [#allocation7], 1
    %2235 = vsyncpa %s2234, 1
    %2236 = vsyncpa [#allocation10], 1
    %2237 = vsyncpa [#allocation13], 1
    %2238 = vsyncpa [#allocation5], 1
    %s2239 = scalar_lea.sflag [#allocation5], 1
    %2240 = vsyncpa %s2239, 1
    %2241 = vsyncpa [#allocation17], 1
    %s2242 = scalar_lea.sflag [#allocation17], 1
    %2243 = vsyncpa %s2242, 1

</llo_original>
